<compile_context>
chip_gen: v6e
topology: v6e:2x2x1
jax: 0.10.0
libtpu: 0.0.40
codegen_flags: <defaults>
</compile_context>

<pallas_src>
import functools

import jax
import jax.numpy as jnp
import numpy as np
from jax.experimental import pallas as pl
from jax.experimental.pallas import tpu as pltpu


def _round_up(x, m):
    return (x + m - 1) // m * m


def _conv3x3_kernel(x_ref, w_ref, o_ref, xp_ref, patch_ref, *,
                    TH, S, H, W, Cin, Cpad, downsample, compute_dtype):
    """One grid step = one TH-row output strip of one batch element.

    x_ref    : (1, H, W, Cin)        full (unpadded) image, resident across strips
    w_ref    : (9*Cin, Cpad)         im2col weight slab (Cout zero-padded to Cpad)
    o_ref    : (1, rows_out, Cpad)   lane-dense output strip
    xp_ref   : (TH+2, W+2, Cin)      VMEM scratch: zero-padded strip (+row halo)
    patch_ref: (TH*W, 9*Cin)         VMEM scratch: im2col patch matrix
    """
    s = pl.program_id(1)

    # ---- build zero-padded strip in VMEM (no HBM padding pass) ----
    xp_ref[...] = jnp.zeros((TH + 2, W + 2, Cin), jnp.float32)
    xp_ref[1:TH + 1, 1:W + 1, :] = (
        x_ref[0, pl.ds(s * TH, TH), :, :].astype(jnp.float32))

    @pl.when(s > 0)
    def _top_halo():
        xp_ref[0:1, 1:W + 1, :] = (
            x_ref[0, pl.ds(s * TH - 1, 1), :, :].astype(jnp.float32))

    @pl.when(s < S - 1)
    def _bottom_halo():
        xp_ref[TH + 1:TH + 2, 1:W + 1, :] = (
            x_ref[0, pl.ds((s + 1) * TH, 1), :, :].astype(jnp.float32))

    # ---- im2col: 9 shifted views packed into one (TH*W, 9*Cin) matrix ----
    t = 0
    for kh in range(3):
        for kw in range(3):
            tap = xp_ref[kh:kh + TH, kw:kw + W, :]            # (TH, W, Cin)
            patch_ref[:, t * Cin:(t + 1) * Cin] = tap.reshape(TH * W, Cin)
            t += 1

    # ---- single MXU contraction, f32 accumulation ----
    y = jnp.dot(patch_ref[...].astype(compute_dtype), w_ref[...],
                preferred_element_type=jnp.float32)           # (TH*W, Cpad)

    if downsample:
        # MaxPool2d(2,2): channel/lane dim (Cpad=128k) stays fixed throughout;
        # only adjacent-row maxima along the leading (sublane) dims.
        y = y.reshape(TH, W // 2, 2, Cpad)
        y = jnp.max(y, axis=2)                                 # (TH, W//2, Cpad)
        y = y.reshape(TH // 2, 2, W // 2, Cpad)
        y = jnp.max(y, axis=1)                                 # (TH//2, W//2, Cpad)
        y = y.reshape((TH // 2) * (W // 2), Cpad)

    o_ref[...] = y[None].astype(o_ref.dtype)


def conv2d_pallas(x_nchw, weight_oihw, downsample=False,
                  compute_dtype=jnp.float32):
    """Matches torch: F.conv2d(x, w, stride=1, padding=1, bias=None)
    followed (optionally) by F.max_pool2d(., 2, 2)."""
    N, Cin, H, W = x_nchw.shape
    Cout, Cin_w, KH, KW = weight_oihw.shape
    assert (KH, KW) == (3, 3) and Cin_w == Cin
    if downsample:
        assert H % 2 == 0 and W % 2 == 0, "MaxPool2d(2,2) path assumes even H, W"
    Ho, Wo = (H // 2, W // 2) if downsample else (H, W)
    Cpad = _round_up(Cout, 128)

    # Row-strip size: prefer small strips (more grid steps for pipelining and
    # v7x 2-TC sharding); fall back to whole-image if it doesn't tile cleanly.
    TH = H
    for cand in (8, 16):
        if H % cand:
            continue
        if downsample and cand % 2:
            continue
        tho = cand // 2 if downsample else cand
        if (tho * Wo) % 8 == 0:
            TH = cand
            break
    S = H // TH
    TH_out = TH // 2 if downsample else TH
    rows_out = TH_out * Wo

    # Layout glue in plain JAX (NO activation zero-padding here).
    x_nhwc = jnp.transpose(x_nchw, (0, 2, 3, 1))               # (N, H, W, Cin)
    w_slab = jnp.transpose(weight_oihw, (2, 3, 1, 0)).reshape(9 * Cin, Cout)
    w_slab = jnp.pad(w_slab, ((0, 0), (0, Cpad - Cout))).astype(compute_dtype)

    kernel = functools.partial(
        _conv3x3_kernel, TH=TH, S=S, H=H, W=W, Cin=Cin, Cpad=Cpad,
        downsample=downsample, compute_dtype=compute_dtype)

    flops = 2 * N * H * W * 9 * Cin * Cout
    bytes_accessed = (x_nhwc.size * x_nhwc.dtype.itemsize
                      + w_slab.size * w_slab.dtype.itemsize
                      + N * Ho * Wo * Cpad * jnp.dtype(x_nchw.dtype).itemsize)

    out = pl.pallas_call(
        kernel,
        out_shape=jax.ShapeDtypeStruct((N, Ho * Wo, Cpad), x_nchw.dtype),
        grid_spec=pltpu.PrefetchScalarGridSpec(
            num_scalar_prefetch=0,
            grid=(N, S),
            in_specs=[
                # Whole image per batch element; constant block index across the
                # strip axis -> DMA'd once per image, stays resident in VMEM.
                pl.BlockSpec((1, H, W, Cin), lambda n, s: (n, 0, 0, 0)),
                pl.BlockSpec((9 * Cin, Cpad), lambda n, s: (0, 0)),
            ],
            out_specs=pl.BlockSpec((1, rows_out, Cpad), lambda n, s: (n, s, 0)),
            scratch_shapes=[
                pltpu.VMEM((TH + 2, W + 2, Cin), jnp.float32),
                pltpu.VMEM((TH * W, 9 * Cin), jnp.float32),
            ],
        ),
        compiler_params=pltpu.CompilerParams(
            dimension_semantics=("parallel", "parallel"),
            vmem_limit_bytes=32 * 1024 * 1024,
        ),
        cost_estimate=pl.CostEstimate(flops=flops, transcendentals=0,
                                      bytes_accessed=bytes_accessed),
    )(x_nhwc, w_slab)

    out = out[:, :, :Cout].reshape(N, Ho, Wo, Cout)
    return jnp.transpose(out, (0, 3, 1, 2))                    # back to NCHW


def _reference(x_nchw, weight_oihw, downsample):
    y = jax.lax.conv_general_dilated(
        x_nchw, weight_oihw, window_strides=(1, 1), padding=((1, 1), (1, 1)),
        dimension_numbers=("NCHW", "OIHW", "NCHW"))
    if downsample:
        y = jax.lax.reduce_window(
            y, -jnp.inf, jax.lax.max,
            window_dimensions=(1, 1, 2, 2), window_strides=(1, 1, 2, 2),
            padding="VALID")
    return y


if __name__ == "__main__":
    key = jax.random.PRNGKey(0)
    k_x, k_w = jax.random.split(key)

    N, Cin, Cout, H, W = 2, 4, 8, 16, 16
    x = jax.random.normal(k_x, (N, Cin, H, W), dtype=jnp.float32)
    bound = 1.0 / np.sqrt(Cin * 3 * 3)
    w = jax.random.uniform(k_w, (Cout, Cin, 3, 3), minval=-bound, maxval=bound,
                           dtype=jnp.float32)

    ok = True
    # f32 MXU path (bit-accuracy flag) for both module configurations.
    for downsample in (False, True):
        y = conv2d_pallas(x, w, downsample=downsample)
        jax.block_until_ready(y)
        y_ref = _reference(x, w, downsample)
        ok &= bool(jnp.allclose(y, y_ref, atol=1e-4, rtol=1e-4))

    # bf16 MXU-operand path (f32 accumulation) -- looser tolerance.
    y_bf16 = conv2d_pallas(x, w, downsample=False, compute_dtype=jnp.bfloat16)
    jax.block_until_ready(y_bf16)
    ok &= bool(jnp.allclose(y_bf16, _reference(x, w, False), atol=3e-2, rtol=3e-2))

    print("KERNEL_OK" if ok else "KERNEL_MISMATCH")
</pallas_src>

<mosaic_0001>
module attributes {stable_mosaic.version = 11 : i64} {
  func.func @_conv3x3_kernel(%arg0: i32, %arg1: i32, %arg2: memref<1x16x16x4xf32, #tpu.memory_space<vmem>>, %arg3: memref<36x128xf32, #tpu.memory_space<vmem>>, %arg4: memref<1x128x128xf32, #tpu.memory_space<vmem>>, %arg5: memref<10x18x4xf32, #tpu.memory_space<vmem>>, %arg6: memref<128x36xf32, #tpu.memory_space<vmem>>) attributes {dimension_semantics = [#tpu.dimension_semantics<parallel>, #tpu.dimension_semantics<parallel>], iteration_bounds = array<i64: 2, 2>, scalar_prefetch = 0 : i64, scratch_operands = 2 : i64, tpu.core_type = #tpu.core_type<tc>, window_params = [{transform_indices = @transform_0, window_bounds = array<i64: 1, 16, 16, 4>}, {pipeline_mode = #tpu.pipeline_mode<synchronous>, transform_indices = @transform_1, window_bounds = array<i64: 36, 128>}, {transform_indices = @transform_2, window_bounds = array<i64: 1, 128, 128>}]} {
    %cst = arith.constant 0.000000e+00 : f32
    %0 = vector.broadcast %cst : f32 to vector<10x18x4xf32>
    %c0 = arith.constant 0 : index
    %c0_0 = arith.constant 0 : index
    %c0_1 = arith.constant 0 : index
    %1 = vector.load %arg5[%c0, %c0_0, %c0_1] : memref<10x18x4xf32, #tpu.memory_space<vmem>>, vector<10x18x4xf32>
    tpu.vector_store %arg5[%c0, %c0_0, %c0_1], %0 {strides = array<i32>} : memref<10x18x4xf32, #tpu.memory_space<vmem>>, vector<10x18x4xf32>,
    %c8_i32 = arith.constant 8 : i32
    %2 = arith.muli %arg1, %c8_i32 : i32
    %c0_2 = arith.constant 0 : index
    %3 = arith.index_cast %2 : i32 to index
    %c0_3 = arith.constant 0 : index
    %c0_4 = arith.constant 0 : index
    %4 = vector.load %arg2[%c0_2, %3, %c0_3, %c0_4] : memref<1x16x16x4xf32, #tpu.memory_space<vmem>>, vector<1x8x16x4xf32>
    %5 = vector.shape_cast %4 : vector<1x8x16x4xf32> to vector<8x16x4xf32>
    %c1 = arith.constant 1 : index
    %c1_5 = arith.constant 1 : index
    %c0_6 = arith.constant 0 : index
    %6 = vector.load %arg5[%c1, %c1_5, %c0_6] : memref<10x18x4xf32, #tpu.memory_space<vmem>>, vector<8x16x4xf32>
    tpu.vector_store %arg5[%c1, %c1_5, %c0_6], %5 {strides = array<i32>} : memref<10x18x4xf32, #tpu.memory_space<vmem>>, vector<8x16x4xf32>,
    %c0_i32 = arith.constant 0 : i32
    %7 = arith.cmpi sgt, %arg1, %c0_i32 : i32
    %8 = arith.extui %7 : i1 to i32
    %c0_i32_7 = arith.constant 0 : i32
    %9 = arith.cmpi ne, %8, %c0_i32_7 : i32
    scf.if %9 {
      %c8_i32_53 = arith.constant 8 : i32
      %45 = arith.muli %arg1, %c8_i32_53 : i32
      %c1_i32_54 = arith.constant 1 : i32
      %46 = arith.subi %45, %c1_i32_54 : i32
      %c0_55 = arith.constant 0 : index
      %47 = arith.index_cast %46 : i32 to index
      %c0_56 = arith.constant 0 : index
      %c0_57 = arith.constant 0 : index
      %48 = vector.load %arg2[%c0_55, %47, %c0_56, %c0_57] : memref<1x16x16x4xf32, #tpu.memory_space<vmem>>, vector<1x1x16x4xf32>
      %49 = vector.shape_cast %48 : vector<1x1x16x4xf32> to vector<1x16x4xf32>
      %c0_58 = arith.constant 0 : index
      %c1_59 = arith.constant 1 : index
      %c0_60 = arith.constant 0 : index
      %50 = vector.load %arg5[%c0_58, %c1_59, %c0_60] : memref<10x18x4xf32, #tpu.memory_space<vmem>>, vector<1x16x4xf32>
      tpu.vector_store %arg5[%c0_58, %c1_59, %c0_60], %49 {strides = array<i32>} : memref<10x18x4xf32, #tpu.memory_space<vmem>>, vector<1x16x4xf32>,
    } else {
    }
    %c1_i32 = arith.constant 1 : i32
    %10 = arith.cmpi slt, %arg1, %c1_i32 : i32
    %11 = arith.extui %10 : i1 to i32
    %c0_i32_8 = arith.constant 0 : i32
    %12 = arith.cmpi ne, %11, %c0_i32_8 : i32
    scf.if %12 {
      %c1_i32_53 = arith.constant 1 : i32
      %45 = arith.addi %arg1, %c1_i32_53 : i32
      %c8_i32_54 = arith.constant 8 : i32
      %46 = arith.muli %45, %c8_i32_54 : i32
      %c0_55 = arith.constant 0 : index
      %47 = arith.index_cast %46 : i32 to index
      %c0_56 = arith.constant 0 : index
      %c0_57 = arith.constant 0 : index
      %48 = vector.load %arg2[%c0_55, %47, %c0_56, %c0_57] : memref<1x16x16x4xf32, #tpu.memory_space<vmem>>, vector<1x1x16x4xf32>
      %49 = vector.shape_cast %48 : vector<1x1x16x4xf32> to vector<1x16x4xf32>
      %c9 = arith.constant 9 : index
      %c1_58 = arith.constant 1 : index
      %c0_59 = arith.constant 0 : index
      %50 = vector.load %arg5[%c9, %c1_58, %c0_59] : memref<10x18x4xf32, #tpu.memory_space<vmem>>, vector<1x16x4xf32>
      tpu.vector_store %arg5[%c9, %c1_58, %c0_59], %49 {strides = array<i32>} : memref<10x18x4xf32, #tpu.memory_space<vmem>>, vector<1x16x4xf32>,
    } else {
    }
    %c0_9 = arith.constant 0 : index
    %c0_10 = arith.constant 0 : index
    %c0_11 = arith.constant 0 : index
    %13 = vector.load %arg5[%c0_9, %c0_10, %c0_11] : memref<10x18x4xf32, #tpu.memory_space<vmem>>, vector<8x16x4xf32>
    %14 = vector.shape_cast %13 : vector<8x16x4xf32> to vector<128x4xf32>
    %c0_12 = arith.constant 0 : index
    %c0_13 = arith.constant 0 : index
    %15 = vector.load %arg6[%c0_12, %c0_13] : memref<128x36xf32, #tpu.memory_space<vmem>>, vector<128x4xf32>
    tpu.vector_store %arg6[%c0_12, %c0_13], %14 {strides = array<i32>} : memref<128x36xf32, #tpu.memory_space<vmem>>, vector<128x4xf32>,
    %c0_14 = arith.constant 0 : index
    %c1_15 = arith.constant 1 : index
    %c0_16 = arith.constant 0 : index
    %16 = vector.load %arg5[%c0_14, %c1_15, %c0_16] : memref<10x18x4xf32, #tpu.memory_space<vmem>>, vector<8x16x4xf32>
    %17 = vector.shape_cast %16 : vector<8x16x4xf32> to vector<128x4xf32>
    %c0_17 = arith.constant 0 : index
    %c4 = arith.constant 4 : index
    %18 = vector.load %arg6[%c0_17, %c4] : memref<128x36xf32, #tpu.memory_space<vmem>>, vector<128x4xf32>
    tpu.vector_store %arg6[%c0_17, %c4], %17 {strides = array<i32>} : memref<128x36xf32, #tpu.memory_space<vmem>>, vector<128x4xf32>,
    %c0_18 = arith.constant 0 : index
    %c2 = arith.constant 2 : index
    %c0_19 = arith.constant 0 : index
    %19 = vector.load %arg5[%c0_18, %c2, %c0_19] : memref<10x18x4xf32, #tpu.memory_space<vmem>>, vector<8x16x4xf32>
    %20 = vector.shape_cast %19 : vector<8x16x4xf32> to vector<128x4xf32>
    %c0_20 = arith.constant 0 : index
    %c8 = arith.constant 8 : index
    %21 = vector.load %arg6[%c0_20, %c8] : memref<128x36xf32, #tpu.memory_space<vmem>>, vector<128x4xf32>
    tpu.vector_store %arg6[%c0_20, %c8], %20 {strides = array<i32>} : memref<128x36xf32, #tpu.memory_space<vmem>>, vector<128x4xf32>,
    %c1_21 = arith.constant 1 : index
    %c0_22 = arith.constant 0 : index
    %c0_23 = arith.constant 0 : index
    %22 = vector.load %arg5[%c1_21, %c0_22, %c0_23] : memref<10x18x4xf32, #tpu.memory_space<vmem>>, vector<8x16x4xf32>
    %23 = vector.shape_cast %22 : vector<8x16x4xf32> to vector<128x4xf32>
    %c0_24 = arith.constant 0 : index
    %c12 = arith.constant 12 : index
    %24 = vector.load %arg6[%c0_24, %c12] : memref<128x36xf32, #tpu.memory_space<vmem>>, vector<128x4xf32>
    tpu.vector_store %arg6[%c0_24, %c12], %23 {strides = array<i32>} : memref<128x36xf32, #tpu.memory_space<vmem>>, vector<128x4xf32>,
    %c1_25 = arith.constant 1 : index
    %c1_26 = arith.constant 1 : index
    %c0_27 = arith.constant 0 : index
    %25 = vector.load %arg5[%c1_25, %c1_26, %c0_27] : memref<10x18x4xf32, #tpu.memory_space<vmem>>, vector<8x16x4xf32>
    %26 = vector.shape_cast %25 : vector<8x16x4xf32> to vector<128x4xf32>
    %c0_28 = arith.constant 0 : index
    %c16 = arith.constant 16 : index
    %27 = vector.load %arg6[%c0_28, %c16] : memref<128x36xf32, #tpu.memory_space<vmem>>, vector<128x4xf32>
    tpu.vector_store %arg6[%c0_28, %c16], %26 {strides = array<i32>} : memref<128x36xf32, #tpu.memory_space<vmem>>, vector<128x4xf32>,
    %c1_29 = arith.constant 1 : index
    %c2_30 = arith.constant 2 : index
    %c0_31 = arith.constant 0 : index
    %28 = vector.load %arg5[%c1_29, %c2_30, %c0_31] : memref<10x18x4xf32, #tpu.memory_space<vmem>>, vector<8x16x4xf32>
    %29 = vector.shape_cast %28 : vector<8x16x4xf32> to vector<128x4xf32>
    %c0_32 = arith.constant 0 : index
    %c20 = arith.constant 20 : index
    %30 = vector.load %arg6[%c0_32, %c20] : memref<128x36xf32, #tpu.memory_space<vmem>>, vector<128x4xf32>
    tpu.vector_store %arg6[%c0_32, %c20], %29 {strides = array<i32>} : memref<128x36xf32, #tpu.memory_space<vmem>>, vector<128x4xf32>,
    %c2_33 = arith.constant 2 : index
    %c0_34 = arith.constant 0 : index
    %c0_35 = arith.constant 0 : index
    %31 = vector.load %arg5[%c2_33, %c0_34, %c0_35] : memref<10x18x4xf32, #tpu.memory_space<vmem>>, vector<8x16x4xf32>
    %32 = vector.shape_cast %31 : vector<8x16x4xf32> to vector<128x4xf32>
    %c0_36 = arith.constant 0 : index
    %c24 = arith.constant 24 : index
    %33 = vector.load %arg6[%c0_36, %c24] : memref<128x36xf32, #tpu.memory_space<vmem>>, vector<128x4xf32>
    tpu.vector_store %arg6[%c0_36, %c24], %32 {strides = array<i32>} : memref<128x36xf32, #tpu.memory_space<vmem>>, vector<128x4xf32>,
    %c2_37 = arith.constant 2 : index
    %c1_38 = arith.constant 1 : index
    %c0_39 = arith.constant 0 : index
    %34 = vector.load %arg5[%c2_37, %c1_38, %c0_39] : memref<10x18x4xf32, #tpu.memory_space<vmem>>, vector<8x16x4xf32>
    %35 = vector.shape_cast %34 : vector<8x16x4xf32> to vector<128x4xf32>
    %c0_40 = arith.constant 0 : index
    %c28 = arith.constant 28 : index
    %36 = vector.load %arg6[%c0_40, %c28] : memref<128x36xf32, #tpu.memory_space<vmem>>, vector<128x4xf32>
    tpu.vector_store %arg6[%c0_40, %c28], %35 {strides = array<i32>} : memref<128x36xf32, #tpu.memory_space<vmem>>, vector<128x4xf32>,
    %c2_41 = arith.constant 2 : index
    %c2_42 = arith.constant 2 : index
    %c0_43 = arith.constant 0 : index
    %37 = vector.load %arg5[%c2_41, %c2_42, %c0_43] : memref<10x18x4xf32, #tpu.memory_space<vmem>>, vector<8x16x4xf32>
    %38 = vector.shape_cast %37 : vector<8x16x4xf32> to vector<128x4xf32>
    %c0_44 = arith.constant 0 : index
    %c32 = arith.constant 32 : index
    %39 = vector.load %arg6[%c0_44, %c32] : memref<128x36xf32, #tpu.memory_space<vmem>>, vector<128x4xf32>
    tpu.vector_store %arg6[%c0_44, %c32], %38 {strides = array<i32>} : memref<128x36xf32, #tpu.memory_space<vmem>>, vector<128x4xf32>,
    %c0_45 = arith.constant 0 : index
    %c0_46 = arith.constant 0 : index
    %40 = vector.load %arg6[%c0_45, %c0_46] : memref<128x36xf32, #tpu.memory_space<vmem>>, vector<128x36xf32>
    %c0_47 = arith.constant 0 : index
    %c0_48 = arith.constant 0 : index
    %41 = vector.load %arg3[%c0_47, %c0_48] : memref<36x128xf32, #tpu.memory_space<vmem>>, vector<36x128xf32>
    %cst_49 = arith.constant dense<0.000000e+00> : vector<128x128xf32>
    %42 = tpu.matmul %40, %41, %cst_49 {dimension_numbers = #tpu.dot_dimension_numbers<[1], [0], [0], [1], [0, 0, 1, 1], [], []>} : vector<128x36xf32>, vector<36x128xf32>, vector<128x128xf32> -> vector<128x128xf32>
    %43 = vector.shape_cast %42 : vector<128x128xf32> to vector<1x128x128xf32>
    %c0_50 = arith.constant 0 : index
    %c0_51 = arith.constant 0 : index
    %c0_52 = arith.constant 0 : index
    %44 = vector.load %arg4[%c0_50, %c0_51, %c0_52] : memref<1x128x128xf32, #tpu.memory_space<vmem>>, vector<1x128x128xf32>
    tpu.vector_store %arg4[%c0_50, %c0_51, %c0_52], %43 {strides = array<i32>} : memref<1x128x128xf32, #tpu.memory_space<vmem>>, vector<1x128x128xf32>,
    return
  }
  func.func @transform_0(%arg0: i32, %arg1: i32) -> (i32, i32, i32, i32) {
    %c0_i32 = arith.constant 0 : i32
    %c0_i32_0 = arith.constant 0 : i32
    %c0_i32_1 = arith.constant 0 : i32
    %c0_i32_2 = arith.constant 0 : i32
    return %arg0, %c0_i32, %c0_i32_0, %c0_i32_1 : i32, i32, i32, i32
  }
  func.func @transform_1(%arg0: i32, %arg1: i32) -> (i32, i32) {
    %c0_i32 = arith.constant 0 : i32
    %c0_i32_0 = arith.constant 0 : i32
    %c0_i32_1 = arith.constant 0 : i32
    return %c0_i32, %c0_i32_0 : i32, i32
  }
  func.func @transform_2(%arg0: i32, %arg1: i32) -> (i32, i32, i32) {
    %c0_i32 = arith.constant 0 : i32
    %c0_i32_0 = arith.constant 0 : i32
    return %arg0, %arg1, %c0_i32 : i32, i32, i32
  }
}

</mosaic_0001>

<llo_original>
// kernel: tpu_custom_call.1
$region0: #{tpu_custom_call.1}
  #allocation0 [shape = 'u32[]', space=smem, size = 0x4, offset = 0x4, fixed_abs, tag = 'smem constant byte address 0x4 - core index']
  #allocation1 [shape = 'u32[144,128]{1,0:T(1,128)}', space=vmem, size = 0x12000, scoped, tag = 'internal scratch']
  #allocation2 [shape = 'f32[10,18,4]{2,1,0:T(8,128)}', space=vmem, size = 0x1e000, scoped, tag = 'scratch operand']
  #allocation3 [shape = 'f32[128,36]{1,0:T(8,128)}', space=vmem, size = 0x10000, scoped, tag = 'scratch operand']
  %s0 = inlined_call_operand.vmem [shape: f32[2,16,16,4], index: 0, kind: input, shape index: {}]
  %s1 = inlined_call_operand.vmem [shape: f32[36,128], index: 1, kind: input, shape index: {}]
  %s2 = inlined_call_operand.hbm [shape: f32[2,256,128], index: 2, kind: output, shape index: {}]
  %s3 = sld [smem:[#allocation0]]
  $region49: #{tpu_custom_call.1} parent=0
    _
  %s5 = ssub.s32 1, %s3
  %s6 = scalar_select 0, %s5, %s3
  $region1: #{tpu_custom_call.1} parent=0
    #allocation4 [shape = 'u8[131072]{0}', space=vmem, size = 0x20000, scoped, tag = 'output window, operand 0']
    #allocation5 [shape = 's32[2]{0}', space=sflag, size = 0x8, scoped, tag = 'scoped memory for tpu_custom_call.1']
    %7 = vsyncpa [#allocation5], 0
    %s8 = scalar_lea.sflag [#allocation5], 1
    %9 = vsyncpa %s8, 0
    loop: start=0, step=1, limit=6
    $region2: #{tpu_custom_call.1} parent=1 // loop_pre_header
      _
    $region3: #{tpu_custom_call.1} parent=1 // loop_header
      %s11 = sphi 0, %s15
      %p12 = scmp.ge.s32.totalorder %s11, 6
      %s18 = sphi 0, %s30
      %s19 = sphi 0, %s26
      %s20 = sphi 0, %s18
      %s21 = sphi 0, %s19
      %s22 = sphi 0, %s20
      %s23 = sphi 0, %s21
      %s33 = sphi 0, %s35
      %s36 = sphi 0, %s33
      %s37 = sphi 0, %s36
      %s53 = sphi 0, %s37
      %s57 = sphi 0, %s57
      %s59 = sphi 0, %s57
      %s60 = sphi 0, %s59
      %s74 = sphi 0, %s60
      %s82 = sphi 0, %s84
      %s85 = sphi 0, %s82
      %s86 = sphi 0, %s85
      %s102 = sphi 0, %s86
    $region4: #{tpu_custom_call.1} parent=1 // loop_header_branch
      %14 = sbr.rel (%p12) target = $region8
    $region5: #{tpu_custom_call.1} parent=1 // loop_body
      %s16 = ssub.s32 %s11, 1
      %s17 = ssub.s32 %s11, 2
      %s24 = sadd.s32 1, %s19
      %p25 = scmp.ge.s32.totalorder %s24, 2
      %s26 = scalar_select %p25, 0, %s24
      %s27 = sadd.s32 1, %s18
      %s28 = scalar_select %p25, %s27, %s18
      %p29 = scmp.ge.s32.totalorder %s28, 2
      %s30 = scalar_select %p29, 0, %s28
      %s31 = ssub.s32 %s18, %s30
      %p32 = scmp.eq.s32.totalorder %s31, 0
      %s34 = sadd.s32 %s33, 1
      %s35 = scalar_select %p32, %s33, %s34
      %p38 = pneg %p32
      %p39 = scmp.eq.s32.totalorder %s11, 3
      %p40 = por %p38, %p39
      %p41 = scmp.ne.s32.totalorder %s33, %s36
      %p42 = scmp.eq.s32.totalorder %s11, 0
      %p43 = por %p41, %p42
      %p44 = scmp.ne.s32.totalorder %s33, %s36
      %p45 = scmp.eq.s32.totalorder %s16, 3
      %p46 = por %p44, %p45
      %p47 = scmp.ne.s32.totalorder %s36, %s37
      %p48 = scmp.eq.s32.totalorder %s16, 0
      %p49 = por %p47, %p48
      %p50 = scmp.ne.s32.totalorder %s36, %s37
      %p51 = scmp.eq.s32.totalorder %s17, 3
      %p52 = por %p50, %p51
      %p54 = scmp.ne.s32.totalorder %s37, %s53
      %p55 = scmp.eq.s32.totalorder %s17, 0
      %p56 = por %p54, %p55
      %s58 = sadd.s32 %s57, 1
      %p61 = scmp.eq.s32.totalorder %s11, 3
      %p62 = scmp.ne.s32.totalorder %s57, %s59
      %p63 = scmp.eq.s32.totalorder %s11, 0
      %p64 = por %p62, %p63
      %p65 = scmp.ne.s32.totalorder %s57, %s59
      %p66 = scmp.eq.s32.totalorder %s16, 3
      %p67 = por %p65, %p66
      %p68 = scmp.ne.s32.totalorder %s59, %s60
      %p69 = scmp.eq.s32.totalorder %s16, 0
      %p70 = por %p68, %p69
      %p71 = scmp.ne.s32.totalorder %s59, %s60
      %p72 = scmp.eq.s32.totalorder %s17, 3
      %p73 = por %p71, %p72
      %p75 = scmp.ne.s32.totalorder %s60, %s74
      %p76 = scmp.eq.s32.totalorder %s17, 0
      %p77 = por %p75, %p76
      %s78 = ssub.s32 %s18, %s30
      %s79 = ssub.s32 %s19, %s26
      %s80 = sor.u32 %s78, %s79
      %p81 = scmp.eq.s32.totalorder %s80, 0
      %s83 = sadd.s32 %s82, 1
      %s84 = scalar_select %p81, %s82, %s83
      %p87 = pneg %p81
      %p88 = scmp.eq.s32.totalorder %s11, 3
      %p89 = por %p87, %p88
      %p90 = scmp.ne.s32.totalorder %s82, %s85
      %p91 = scmp.eq.s32.totalorder %s11, 0
      %p92 = por %p90, %p91
      %p93 = scmp.ne.s32.totalorder %s82, %s85
      %p94 = scmp.eq.s32.totalorder %s16, 3
      %p95 = por %p93, %p94
      %p96 = scmp.ne.s32.totalorder %s85, %s86
      %p97 = scmp.eq.s32.totalorder %s16, 0
      %p98 = por %p96, %p97
      %p99 = scmp.ne.s32.totalorder %s85, %s86
      %p100 = scmp.eq.s32.totalorder %s17, 3
      %p101 = por %p99, %p100
      %p103 = scmp.ne.s32.totalorder %s86, %s102
      %p104 = scmp.eq.s32.totalorder %s17, 0
      %p105 = por %p103, %p104
      %p106 = scmp.le.s32.totalorder 1, %s11
      %p107 = scmp.lt.s32.totalorder %s11, 5
      %p108 = pnand %p106, %p107
      %p109 = pneg %p108
      // Predicated region
      $region9: #{tpu_custom_call.1} parent=5 // pred_check
        _
      $region10: #{tpu_custom_call.1} parent=5 // pred_check_branch
        %111 = sbr.rel (%p108) target = $region12
      $region11: #{tpu_custom_call.1} parent=5 // pred_region
        %s112 = ssub.s32 %s11, 1
        // Predicated region
        $region13: #{tpu_custom_call.1} parent=11 // pred_check
          %p113 = pneg %p70
        $region14: #{tpu_custom_call.1} parent=11 // pred_check_branch
          %115 = sbr.rel (%p113) target = $region16
        $region15: #{tpu_custom_call.1} parent=11 // pred_region
          _
        $region16: #{tpu_custom_call.1} parent=11 // pred_fallthru
          _
      $region12: #{tpu_custom_call.1} parent=5 // pred_fallthru
        _
      %p116 = scmp.lt.s32.totalorder %s11, 4
      // Predicated region
      $region17: #{tpu_custom_call.1} parent=5 // pred_check
        %p117 = pneg %p116
      $region18: #{tpu_custom_call.1} parent=5 // pred_check_branch
        %119 = sbr.rel (%p117) target = $region20
      $region19: #{tpu_custom_call.1} parent=5 // pred_region
        // Predicated region
        $region21: #{tpu_custom_call.1} parent=19 // pred_check
          %p120 = pneg %p43
        $region22: #{tpu_custom_call.1} parent=19 // pred_check_branch
          %122 = sbr.rel (%p120) target = $region24
        $region23: #{tpu_custom_call.1} parent=19 // pred_region
          %p123 = scmp.lt.s32.totalorder %s18, 1
          %s124 = scalar_select %p123, %s18, 1
          %s125 = smul.addr %s124, 32
          %s126 = smul.addr %s125, 8
          %s127 = scalar_lea.vmem %s0, %s126
        $region24: #{tpu_custom_call.1} parent=19 // pred_fallthru
          _
      $region20: #{tpu_custom_call.1} parent=5 // pred_fallthru
        _
      %p128 = scmp.le.s32.totalorder 1, %s11
      %p129 = scmp.lt.s32.totalorder %s11, 5
      %p130 = pnand %p128, %p129
      %p131 = pneg %p130
      // Predicated region
      $region25: #{tpu_custom_call.1} parent=5 // pred_check
        _
      $region26: #{tpu_custom_call.1} parent=5 // pred_check_branch
        %133 = sbr.rel (%p130) target = $region28
      $region27: #{tpu_custom_call.1} parent=5 // pred_region
        %s134 = ssub.s32 %s11, 1
        %p135 = scmp.lt.s32.totalorder %s20, 1
        %s136 = scalar_select %p135, %s20, 1
        %s137 = smul.addr %s136, 32
        %s138 = smul.addr %s137, 8
        %s139 = scalar_lea.vmem %s0, %s138
        %p140 = pneg %p49
        %p141 = pneg %p46
        %p142 = pneg %p70
        %p143 = pneg %p67
        %p144 = pneg %p98
        %p145 = pneg %p95
        %s146 = sand.u32 %s85, 1
        %s147 = scalar_lea.sflag [#allocation5], %s146
        %s148 = sand.u32 %s85, 1
        %s149 = smul.addr %s148, 128
        %s150 = scalar_lea.vmem [#allocation4], %s149
        %p151 = scmp.lt.s32.totalorder %s20, 1
        %s152 = scalar_select %p151, %s20, 1
        %s153 = smul.addr %s152, 32
        %s154 = smul.addr %s153, 8
        %s155 = scalar_lea.vmem %s0, %s154
        %s156 = smul.u32 16, %s21
        %vm157 = vcmask 31744
        %158 = vst.msk [vmem:[#allocation2] sm:$0xff] %vm157, 0.0
        %159 = vst.msk [vmem:[#allocation2 + $0x8] sm:$0xff] %vm157, 0.0
        %vm160 = vcmask 25600
        %161 = vst.msk [vmem:[#allocation2 + $0x10] sm:$0x3] %vm160, 0.0
        %162 = vst.msk [vmem:[#allocation2 + $0x18] sm:$0xff] %vm157, 0.0
        %163 = vst.msk [vmem:[#allocation2 + $0x20] sm:$0xff] %vm157, 0.0
        %164 = vst.msk [vmem:[#allocation2 + $0x28] sm:$0x3] %vm160, 0.0
        %165 = vst.msk [vmem:[#allocation2 + $0x30] sm:$0xff] %vm157, 0.0
        %166 = vst.msk [vmem:[#allocation2 + $0x38] sm:$0xff] %vm157, 0.0
        %167 = vst.msk [vmem:[#allocation2 + $0x40] sm:$0x3] %vm160, 0.0
        %168 = vst.msk [vmem:[#allocation2 + $0x48] sm:$0xff] %vm157, 0.0
        %169 = vst.msk [vmem:[#allocation2 + $0x50] sm:$0xff] %vm157, 0.0
        %170 = vst.msk [vmem:[#allocation2 + $0x58] sm:$0x3] %vm160, 0.0
        %171 = vst.msk [vmem:[#allocation2 + $0x60] sm:$0xff] %vm157, 0.0
        %172 = vst.msk [vmem:[#allocation2 + $0x68] sm:$0xff] %vm157, 0.0
        %173 = vst.msk [vmem:[#allocation2 + $0x70] sm:$0x3] %vm160, 0.0
        %174 = vst.msk [vmem:[#allocation2 + $0x78] sm:$0xff] %vm157, 0.0
        %175 = vst.msk [vmem:[#allocation2 + $0x80] sm:$0xff] %vm157, 0.0
        %176 = vst.msk [vmem:[#allocation2 + $0x88] sm:$0x3] %vm160, 0.0
        %177 = vst.msk [vmem:[#allocation2 + $0x90] sm:$0xff] %vm157, 0.0
        %178 = vst.msk [vmem:[#allocation2 + $0x98] sm:$0xff] %vm157, 0.0
        %179 = vst.msk [vmem:[#allocation2 + $0xa0] sm:$0x3] %vm160, 0.0
        %180 = vst.msk [vmem:[#allocation2 + $0xa8] sm:$0xff] %vm157, 0.0
        %181 = vst.msk [vmem:[#allocation2 + $0xb0] sm:$0xff] %vm157, 0.0
        %182 = vst.msk [vmem:[#allocation2 + $0xb8] sm:$0x3] %vm160, 0.0
        %183 = vst.msk [vmem:[#allocation2 + $0xc0] sm:$0xff] %vm157, 0.0
        %184 = vst.msk [vmem:[#allocation2 + $0xc8] sm:$0xff] %vm157, 0.0
        %185 = vst.msk [vmem:[#allocation2 + $0xd0] sm:$0x3] %vm160, 0.0
        %186 = vst.msk [vmem:[#allocation2 + $0xd8] sm:$0xff] %vm157, 0.0
        %187 = vst.msk [vmem:[#allocation2 + $0xe0] sm:$0xff] %vm157, 0.0
        %188 = vst.msk [vmem:[#allocation2 + $0xe8] sm:$0x3] %vm160, 0.0
        %s189 = smul.u32 %s21, 8
        %s190 = smul.u32 %s189, 16
        %s191 = scalar_lea.vmem %s155, %s190
        %v192 = vld [vmem:[%s191] sm:$0xff]
        %v193 = vld [vmem:[%s191 + $0x8] sm:$0xff]
        %v194 = vld [vmem:[%s191 + $0x10] sm:$0xff]
        %v195 = vld [vmem:[%s191 + $0x18] sm:$0xff]
        %v196 = vld [vmem:[%s191 + $0x20] sm:$0xff]
        %v197 = vld [vmem:[%s191 + $0x28] sm:$0xff]
        %v198 = vld [vmem:[%s191 + $0x30] sm:$0xff]
        %v199 = vld [vmem:[%s191 + $0x38] sm:$0xff]
        %v200 = vld [vmem:[%s191 + $0x40] sm:$0xff]
        %v201 = vld [vmem:[%s191 + $0x48] sm:$0xff]
        %v202 = vld [vmem:[%s191 + $0x50] sm:$0xff]
        %v203 = vld [vmem:[%s191 + $0x58] sm:$0xff]
        %v204 = vld [vmem:[%s191 + $0x60] sm:$0xff]
        %v205 = vld [vmem:[%s191 + $0x68] sm:$0xff]
        %v206 = vld [vmem:[%s191 + $0x70] sm:$0xff]
        %v207 = vld [vmem:[%s191 + $0x78] sm:$0xff]
        %s208 = scalar_lea.vmem [#allocation2], 24
        %209 = vst.msk [vmem:[%s208 + $0x1] sm:$0xff] %vm157, %v192
        %210 = vst.msk [vmem:[%s208 + $0x9] sm:$0xff] %vm157, %v193
        %211 = vst.msk [vmem:[%s208 + $0x19] sm:$0xff] %vm157, %v194
        %212 = vst.msk [vmem:[%s208 + $0x21] sm:$0xff] %vm157, %v195
        %213 = vst.msk [vmem:[%s208 + $0x31] sm:$0xff] %vm157, %v196
        %214 = vst.msk [vmem:[%s208 + $0x39] sm:$0xff] %vm157, %v197
        %215 = vst.msk [vmem:[%s208 + $0x49] sm:$0xff] %vm157, %v198
        %216 = vst.msk [vmem:[%s208 + $0x51] sm:$0xff] %vm157, %v199
        %217 = vst.msk [vmem:[%s208 + $0x61] sm:$0xff] %vm157, %v200
        %218 = vst.msk [vmem:[%s208 + $0x69] sm:$0xff] %vm157, %v201
        %219 = vst.msk [vmem:[%s208 + $0x79] sm:$0xff] %vm157, %v202
        %220 = vst.msk [vmem:[%s208 + $0x81] sm:$0xff] %vm157, %v203
        %221 = vst.msk [vmem:[%s208 + $0x91] sm:$0xff] %vm157, %v204
        %222 = vst.msk [vmem:[%s208 + $0x99] sm:$0xff] %vm157, %v205
        %223 = vst.msk [vmem:[%s208 + $0xa9] sm:$0xff] %vm157, %v206
        %224 = vst.msk [vmem:[%s208 + $0xb1] sm:$0xff] %vm157, %v207
        %p225 = scmp.gt.s32.totalorder %s21, 0
        // Predicated region
        $region29: #{tpu_custom_call.1} parent=27 // pred_check
          %p226 = pneg %p225
        $region30: #{tpu_custom_call.1} parent=27 // pred_check_branch
          %228 = sbr.rel (%p226) target = $region32
        $region31: #{tpu_custom_call.1} parent=27 // pred_region
          %s229 = ssub.s32 %s189, 1
          %s230 = smul.u32 %s229, 16
          %s231 = scalar_lea.vmem %s155, %s230
          %v232 = vld [vmem:[%s231] sm:$0xff]
          %v233 = vld [vmem:[%s231 + $0x8] sm:$0xff]
          %234 = vst.msk [vmem:[#allocation2 + $0x1] sm:$0xff] %vm157, %v232
          %235 = vst.msk [vmem:[#allocation2 + $0x9] sm:$0xff] %vm157, %v233
        $region32: #{tpu_custom_call.1} parent=27 // pred_fallthru
          _
        %p236 = scmp.lt.s32.totalorder %s21, 1
        // Predicated region
        $region33: #{tpu_custom_call.1} parent=27 // pred_check
          %p237 = pneg %p236
        $region34: #{tpu_custom_call.1} parent=27 // pred_check_branch
          %239 = sbr.rel (%p237) target = $region36
        $region35: #{tpu_custom_call.1} parent=27 // pred_region
          %s240 = sadd.s32 %s21, 1
          %s241 = smul.u32 %s240, 8
          %s242 = smul.u32 %s241, 16
          %s243 = scalar_lea.vmem %s155, %s242
          %v244 = vld [vmem:[%s243] sm:$0xff]
          %v245 = vld [vmem:[%s243 + $0x8] sm:$0xff]
          %s246 = scalar_lea.vmem [#allocation2], 216
          %247 = vst.msk [vmem:[%s246 + $0x1] sm:$0xff] %vm157, %v244
          %248 = vst.msk [vmem:[%s246 + $0x9] sm:$0xff] %vm157, %v245
        $region36: #{tpu_custom_call.1} parent=27 // pred_fallthru
          _
        %v249 = vld [vmem:[#allocation2] sm:$0xff]
        %v250 = vld [vmem:[#allocation2 + $0x8] sm:$0xff]
        %v251 = vld [vmem:[#allocation2 + $0x18] sm:$0xff]
        %v252 = vld [vmem:[#allocation2 + $0x20] sm:$0xff]
        %v253 = vld [vmem:[#allocation2 + $0x30] sm:$0xff]
        %v254 = vld [vmem:[#allocation2 + $0x38] sm:$0xff]
        %v255 = vld [vmem:[#allocation2 + $0x48] sm:$0xff]
        %v256 = vld [vmem:[#allocation2 + $0x50] sm:$0xff]
        %v257 = vld [vmem:[#allocation2 + $0x60] sm:$0xff]
        %v258 = vld [vmem:[#allocation2 + $0x68] sm:$0xff]
        %v259 = vld [vmem:[#allocation2 + $0x78] sm:$0xff]
        %v260 = vld [vmem:[#allocation2 + $0x80] sm:$0xff]
        %v261 = vld [vmem:[#allocation2 + $0x90] sm:$0xff]
        %v262 = vld [vmem:[#allocation2 + $0x98] sm:$0xff]
        %v263 = vld [vmem:[#allocation2 + $0xa8] sm:$0xff]
        %v264 = vld [vmem:[#allocation2 + $0xb0] sm:$0xff]
        %265 = vst.msk [vmem:[#allocation3] sm:$0xff] %vm157, %v249
        %266 = vst.msk [vmem:[#allocation3 + $0x8] sm:$0xff] %vm157, %v250
        %267 = vst.msk [vmem:[#allocation3 + $0x10] sm:$0xff] %vm157, %v251
        %268 = vst.msk [vmem:[#allocation3 + $0x18] sm:$0xff] %vm157, %v252
        %269 = vst.msk [vmem:[#allocation3 + $0x20] sm:$0xff] %vm157, %v253
        %270 = vst.msk [vmem:[#allocation3 + $0x28] sm:$0xff] %vm157, %v254
        %271 = vst.msk [vmem:[#allocation3 + $0x30] sm:$0xff] %vm157, %v255
        %272 = vst.msk [vmem:[#allocation3 + $0x38] sm:$0xff] %vm157, %v256
        %273 = vst.msk [vmem:[#allocation3 + $0x40] sm:$0xff] %vm157, %v257
        %274 = vst.msk [vmem:[#allocation3 + $0x48] sm:$0xff] %vm157, %v258
        %275 = vst.msk [vmem:[#allocation3 + $0x50] sm:$0xff] %vm157, %v259
        %276 = vst.msk [vmem:[#allocation3 + $0x58] sm:$0xff] %vm157, %v260
        %277 = vst.msk [vmem:[#allocation3 + $0x60] sm:$0xff] %vm157, %v261
        %278 = vst.msk [vmem:[#allocation3 + $0x68] sm:$0xff] %vm157, %v262
        %279 = vst.msk [vmem:[#allocation3 + $0x70] sm:$0xff] %vm157, %v263
        %280 = vst.msk [vmem:[#allocation3 + $0x78] sm:$0xff] %vm157, %v264
        %v281 = vld [vmem:[#allocation2 + $0x1] sm:$0xff]
        %v282 = vld [vmem:[#allocation2 + $0x9] sm:$0xff]
        %v283 = vld [vmem:[#allocation2 + $0x19] sm:$0xff]
        %v284 = vld [vmem:[#allocation2 + $0x21] sm:$0xff]
        %v285 = vld [vmem:[#allocation2 + $0x31] sm:$0xff]
        %v286 = vld [vmem:[#allocation2 + $0x39] sm:$0xff]
        %v287 = vld [vmem:[#allocation2 + $0x49] sm:$0xff]
        %v288 = vld [vmem:[#allocation2 + $0x51] sm:$0xff]
        %v289 = vld [vmem:[#allocation2 + $0x61] sm:$0xff]
        %v290 = vld [vmem:[#allocation2 + $0x69] sm:$0xff]
        %v291 = vld [vmem:[#allocation2 + $0x79] sm:$0xff]
        %v292 = vld [vmem:[#allocation2 + $0x81] sm:$0xff]
        %v293 = vld [vmem:[#allocation2 + $0x91] sm:$0xff]
        %v294 = vld [vmem:[#allocation2 + $0x99] sm:$0xff]
        %v295 = vld [vmem:[#allocation2 + $0xa9] sm:$0xff]
        %v296 = vld [vmem:[#allocation2 + $0xb1] sm:$0xff]
        %313 = vrot.lane.b32.xlu0 %v281, 4
        %v314 = vpop.permute.xlu0 %313
        %315 = vrot.lane.b32.xlu0 %v282, 4
        %v316 = vpop.permute.xlu0 %315
        %317 = vrot.lane.b32.xlu0 %v283, 4
        %v318 = vpop.permute.xlu0 %317
        %319 = vrot.lane.b32.xlu0 %v284, 4
        %v320 = vpop.permute.xlu0 %319
        %321 = vrot.lane.b32.xlu0 %v285, 4
        %v322 = vpop.permute.xlu0 %321
        %323 = vrot.lane.b32.xlu0 %v286, 4
        %v324 = vpop.permute.xlu0 %323
        %325 = vrot.lane.b32.xlu0 %v287, 4
        %v326 = vpop.permute.xlu0 %325
        %327 = vrot.lane.b32.xlu0 %v288, 4
        %v328 = vpop.permute.xlu0 %327
        %329 = vrot.lane.b32.xlu0 %v289, 4
        %v330 = vpop.permute.xlu0 %329
        %331 = vrot.lane.b32.xlu0 %v290, 4
        %v332 = vpop.permute.xlu0 %331
        %333 = vrot.lane.b32.xlu0 %v291, 4
        %v334 = vpop.permute.xlu0 %333
        %335 = vrot.lane.b32.xlu0 %v292, 4
        %v336 = vpop.permute.xlu0 %335
        %337 = vrot.lane.b32.xlu0 %v293, 4
        %v338 = vpop.permute.xlu0 %337
        %339 = vrot.lane.b32.xlu0 %v294, 4
        %v340 = vpop.permute.xlu0 %339
        %341 = vrot.lane.b32.xlu0 %v295, 4
        %v342 = vpop.permute.xlu0 %341
        %343 = vrot.lane.b32.xlu0 %v296, 4
        %v344 = vpop.permute.xlu0 %343
        %vm361 = vcmask 64544
        %362 = vst.msk [vmem:[#allocation3] sm:$0xff] %vm361, %v314
        %363 = vst.msk [vmem:[#allocation3 + $0x8] sm:$0xff] %vm361, %v316
        %364 = vst.msk [vmem:[#allocation3 + $0x10] sm:$0xff] %vm361, %v318
        %365 = vst.msk [vmem:[#allocation3 + $0x18] sm:$0xff] %vm361, %v320
        %366 = vst.msk [vmem:[#allocation3 + $0x20] sm:$0xff] %vm361, %v322
        %367 = vst.msk [vmem:[#allocation3 + $0x28] sm:$0xff] %vm361, %v324
        %368 = vst.msk [vmem:[#allocation3 + $0x30] sm:$0xff] %vm361, %v326
        %369 = vst.msk [vmem:[#allocation3 + $0x38] sm:$0xff] %vm361, %v328
        %370 = vst.msk [vmem:[#allocation3 + $0x40] sm:$0xff] %vm361, %v330
        %371 = vst.msk [vmem:[#allocation3 + $0x48] sm:$0xff] %vm361, %v332
        %372 = vst.msk [vmem:[#allocation3 + $0x50] sm:$0xff] %vm361, %v334
        %373 = vst.msk [vmem:[#allocation3 + $0x58] sm:$0xff] %vm361, %v336
        %374 = vst.msk [vmem:[#allocation3 + $0x60] sm:$0xff] %vm361, %v338
        %375 = vst.msk [vmem:[#allocation3 + $0x68] sm:$0xff] %vm361, %v340
        %376 = vst.msk [vmem:[#allocation3 + $0x70] sm:$0xff] %vm361, %v342
        %377 = vst.msk [vmem:[#allocation3 + $0x78] sm:$0xff] %vm361, %v344
        %v378 = vld [vmem:[#allocation2 + $0x2] sm:$0xff]
        %v379 = vld [vmem:[#allocation2 + $0xa] sm:$0xff]
        %v380 = vld [vmem:[#allocation2 + $0x1a] sm:$0xff]
        %v381 = vld [vmem:[#allocation2 + $0x22] sm:$0xff]
        %v382 = vld [vmem:[#allocation2 + $0x32] sm:$0xff]
        %v383 = vld [vmem:[#allocation2 + $0x3a] sm:$0xff]
        %v384 = vld [vmem:[#allocation2 + $0x4a] sm:$0xff]
        %v385 = vld [vmem:[#allocation2 + $0x52] sm:$0xff]
        %v386 = vld [vmem:[#allocation2 + $0x62] sm:$0xff]
        %v387 = vld [vmem:[#allocation2 + $0x6a] sm:$0xff]
        %v388 = vld [vmem:[#allocation2 + $0x7a] sm:$0xff]
        %v389 = vld [vmem:[#allocation2 + $0x82] sm:$0xff]
        %v390 = vld [vmem:[#allocation2 + $0x92] sm:$0xff]
        %v391 = vld [vmem:[#allocation2 + $0x9a] sm:$0xff]
        %v392 = vld [vmem:[#allocation2 + $0xaa] sm:$0xff]
        %v393 = vld [vmem:[#allocation2 + $0xb2] sm:$0xff]
        %410 = vrot.lane.b32.xlu0 %v378, 8
        %v411 = vpop.permute.xlu0 %410
        %412 = vrot.lane.b32.xlu0 %v379, 8
        %v413 = vpop.permute.xlu0 %412
        %414 = vrot.lane.b32.xlu0 %v380, 8
        %v415 = vpop.permute.xlu0 %414
        %416 = vrot.lane.b32.xlu0 %v381, 8
        %v417 = vpop.permute.xlu0 %416
        %418 = vrot.lane.b32.xlu0 %v382, 8
        %v419 = vpop.permute.xlu0 %418
        %420 = vrot.lane.b32.xlu0 %v383, 8
        %v421 = vpop.permute.xlu0 %420
        %422 = vrot.lane.b32.xlu0 %v384, 8
        %v423 = vpop.permute.xlu0 %422
        %424 = vrot.lane.b32.xlu0 %v385, 8
        %v425 = vpop.permute.xlu0 %424
        %426 = vrot.lane.b32.xlu0 %v386, 8
        %v427 = vpop.permute.xlu0 %426
        %428 = vrot.lane.b32.xlu0 %v387, 8
        %v429 = vpop.permute.xlu0 %428
        %430 = vrot.lane.b32.xlu0 %v388, 8
        %v431 = vpop.permute.xlu0 %430
        %432 = vrot.lane.b32.xlu0 %v389, 8
        %v433 = vpop.permute.xlu0 %432
        %434 = vrot.lane.b32.xlu0 %v390, 8
        %v435 = vpop.permute.xlu0 %434
        %436 = vrot.lane.b32.xlu0 %v391, 8
        %v437 = vpop.permute.xlu0 %436
        %438 = vrot.lane.b32.xlu0 %v392, 8
        %v439 = vpop.permute.xlu0 %438
        %440 = vrot.lane.b32.xlu0 %v393, 8
        %v441 = vpop.permute.xlu0 %440
        %vm458 = vcmask 97344
        %459 = vst.msk [vmem:[#allocation3] sm:$0xff] %vm458, %v411
        %460 = vst.msk [vmem:[#allocation3 + $0x8] sm:$0xff] %vm458, %v413
        %461 = vst.msk [vmem:[#allocation3 + $0x10] sm:$0xff] %vm458, %v415
        %462 = vst.msk [vmem:[#allocation3 + $0x18] sm:$0xff] %vm458, %v417
        %463 = vst.msk [vmem:[#allocation3 + $0x20] sm:$0xff] %vm458, %v419
        %464 = vst.msk [vmem:[#allocation3 + $0x28] sm:$0xff] %vm458, %v421
        %465 = vst.msk [vmem:[#allocation3 + $0x30] sm:$0xff] %vm458, %v423
        %466 = vst.msk [vmem:[#allocation3 + $0x38] sm:$0xff] %vm458, %v425
        %467 = vst.msk [vmem:[#allocation3 + $0x40] sm:$0xff] %vm458, %v427
        %468 = vst.msk [vmem:[#allocation3 + $0x48] sm:$0xff] %vm458, %v429
        %469 = vst.msk [vmem:[#allocation3 + $0x50] sm:$0xff] %vm458, %v431
        %470 = vst.msk [vmem:[#allocation3 + $0x58] sm:$0xff] %vm458, %v433
        %471 = vst.msk [vmem:[#allocation3 + $0x60] sm:$0xff] %vm458, %v435
        %472 = vst.msk [vmem:[#allocation3 + $0x68] sm:$0xff] %vm458, %v437
        %473 = vst.msk [vmem:[#allocation3 + $0x70] sm:$0xff] %vm458, %v439
        %474 = vst.msk [vmem:[#allocation3 + $0x78] sm:$0xff] %vm458, %v441
        %v475 = vld [vmem:[%s208] sm:$0xff]
        %v476 = vld [vmem:[%s208 + $0x8] sm:$0xff]
        %v477 = vld [vmem:[%s208 + $0x18] sm:$0xff]
        %v478 = vld [vmem:[%s208 + $0x20] sm:$0xff]
        %v479 = vld [vmem:[%s208 + $0x30] sm:$0xff]
        %v480 = vld [vmem:[%s208 + $0x38] sm:$0xff]
        %v481 = vld [vmem:[%s208 + $0x48] sm:$0xff]
        %v482 = vld [vmem:[%s208 + $0x50] sm:$0xff]
        %v483 = vld [vmem:[%s208 + $0x60] sm:$0xff]
        %v484 = vld [vmem:[%s208 + $0x68] sm:$0xff]
        %v485 = vld [vmem:[%s208 + $0x78] sm:$0xff]
        %v486 = vld [vmem:[%s208 + $0x80] sm:$0xff]
        %v487 = vld [vmem:[%s208 + $0x90] sm:$0xff]
        %v488 = vld [vmem:[%s208 + $0x98] sm:$0xff]
        %v489 = vld [vmem:[%s208 + $0xa8] sm:$0xff]
        %v490 = vld [vmem:[%s208 + $0xb0] sm:$0xff]
        %507 = vrot.lane.b32.xlu0 %v475, 12
        %v508 = vpop.permute.xlu0 %507
        %509 = vrot.lane.b32.xlu0 %v476, 12
        %v510 = vpop.permute.xlu0 %509
        %511 = vrot.lane.b32.xlu0 %v477, 12
        %v512 = vpop.permute.xlu0 %511
        %513 = vrot.lane.b32.xlu0 %v478, 12
        %v514 = vpop.permute.xlu0 %513
        %515 = vrot.lane.b32.xlu0 %v479, 12
        %v516 = vpop.permute.xlu0 %515
        %517 = vrot.lane.b32.xlu0 %v480, 12
        %v518 = vpop.permute.xlu0 %517
        %519 = vrot.lane.b32.xlu0 %v481, 12
        %v520 = vpop.permute.xlu0 %519
        %521 = vrot.lane.b32.xlu0 %v482, 12
        %v522 = vpop.permute.xlu0 %521
        %523 = vrot.lane.b32.xlu0 %v483, 12
        %v524 = vpop.permute.xlu0 %523
        %525 = vrot.lane.b32.xlu0 %v484, 12
        %v526 = vpop.permute.xlu0 %525
        %527 = vrot.lane.b32.xlu0 %v485, 12
        %v528 = vpop.permute.xlu0 %527
        %529 = vrot.lane.b32.xlu0 %v486, 12
        %v530 = vpop.permute.xlu0 %529
        %531 = vrot.lane.b32.xlu0 %v487, 12
        %v532 = vpop.permute.xlu0 %531
        %533 = vrot.lane.b32.xlu0 %v488, 12
        %v534 = vpop.permute.xlu0 %533
        %535 = vrot.lane.b32.xlu0 %v489, 12
        %v536 = vpop.permute.xlu0 %535
        %537 = vrot.lane.b32.xlu0 %v490, 12
        %v538 = vpop.permute.xlu0 %537
        %vm555 = vcmask 130144
        %556 = vst.msk [vmem:[#allocation3] sm:$0xff] %vm555, %v508
        %557 = vst.msk [vmem:[#allocation3 + $0x8] sm:$0xff] %vm555, %v510
        %558 = vst.msk [vmem:[#allocation3 + $0x10] sm:$0xff] %vm555, %v512
        %559 = vst.msk [vmem:[#allocation3 + $0x18] sm:$0xff] %vm555, %v514
        %560 = vst.msk [vmem:[#allocation3 + $0x20] sm:$0xff] %vm555, %v516
        %561 = vst.msk [vmem:[#allocation3 + $0x28] sm:$0xff] %vm555, %v518
        %562 = vst.msk [vmem:[#allocation3 + $0x30] sm:$0xff] %vm555, %v520
        %563 = vst.msk [vmem:[#allocation3 + $0x38] sm:$0xff] %vm555, %v522
        %564 = vst.msk [vmem:[#allocation3 + $0x40] sm:$0xff] %vm555, %v524
        %565 = vst.msk [vmem:[#allocation3 + $0x48] sm:$0xff] %vm555, %v526
        %566 = vst.msk [vmem:[#allocation3 + $0x50] sm:$0xff] %vm555, %v528
        %567 = vst.msk [vmem:[#allocation3 + $0x58] sm:$0xff] %vm555, %v530
        %568 = vst.msk [vmem:[#allocation3 + $0x60] sm:$0xff] %vm555, %v532
        %569 = vst.msk [vmem:[#allocation3 + $0x68] sm:$0xff] %vm555, %v534
        %570 = vst.msk [vmem:[#allocation3 + $0x70] sm:$0xff] %vm555, %v536
        %571 = vst.msk [vmem:[#allocation3 + $0x78] sm:$0xff] %vm555, %v538
        %v572 = vld [vmem:[%s208 + $0x1] sm:$0xff]
        %v573 = vld [vmem:[%s208 + $0x9] sm:$0xff]
        %v574 = vld [vmem:[%s208 + $0x19] sm:$0xff]
        %v575 = vld [vmem:[%s208 + $0x21] sm:$0xff]
        %v576 = vld [vmem:[%s208 + $0x31] sm:$0xff]
        %v577 = vld [vmem:[%s208 + $0x39] sm:$0xff]
        %v578 = vld [vmem:[%s208 + $0x49] sm:$0xff]
        %v579 = vld [vmem:[%s208 + $0x51] sm:$0xff]
        %v580 = vld [vmem:[%s208 + $0x61] sm:$0xff]
        %v581 = vld [vmem:[%s208 + $0x69] sm:$0xff]
        %v582 = vld [vmem:[%s208 + $0x79] sm:$0xff]
        %v583 = vld [vmem:[%s208 + $0x81] sm:$0xff]
        %v584 = vld [vmem:[%s208 + $0x91] sm:$0xff]
        %v585 = vld [vmem:[%s208 + $0x99] sm:$0xff]
        %v586 = vld [vmem:[%s208 + $0xa9] sm:$0xff]
        %v587 = vld [vmem:[%s208 + $0xb1] sm:$0xff]
        %604 = vrot.lane.b32.xlu0 %v572, 16
        %v605 = vpop.permute.xlu0 %604
        %606 = vrot.lane.b32.xlu0 %v573, 16
        %v607 = vpop.permute.xlu0 %606
        %608 = vrot.lane.b32.xlu0 %v574, 16
        %v609 = vpop.permute.xlu0 %608
        %610 = vrot.lane.b32.xlu0 %v575, 16
        %v611 = vpop.permute.xlu0 %610
        %612 = vrot.lane.b32.xlu0 %v576, 16
        %v613 = vpop.permute.xlu0 %612
        %614 = vrot.lane.b32.xlu0 %v577, 16
        %v615 = vpop.permute.xlu0 %614
        %616 = vrot.lane.b32.xlu0 %v578, 16
        %v617 = vpop.permute.xlu0 %616
        %618 = vrot.lane.b32.xlu0 %v579, 16
        %v619 = vpop.permute.xlu0 %618
        %620 = vrot.lane.b32.xlu0 %v580, 16
        %v621 = vpop.permute.xlu0 %620
        %622 = vrot.lane.b32.xlu0 %v581, 16
        %v623 = vpop.permute.xlu0 %622
        %624 = vrot.lane.b32.xlu0 %v582, 16
        %v625 = vpop.permute.xlu0 %624
        %626 = vrot.lane.b32.xlu0 %v583, 16
        %v627 = vpop.permute.xlu0 %626
        %628 = vrot.lane.b32.xlu0 %v584, 16
        %v629 = vpop.permute.xlu0 %628
        %630 = vrot.lane.b32.xlu0 %v585, 16
        %v631 = vpop.permute.xlu0 %630
        %632 = vrot.lane.b32.xlu0 %v586, 16
        %v633 = vpop.permute.xlu0 %632
        %634 = vrot.lane.b32.xlu0 %v587, 16
        %v635 = vpop.permute.xlu0 %634
        %vm652 = vcmask 162944
        %653 = vst.msk [vmem:[#allocation3] sm:$0xff] %vm652, %v605
        %654 = vst.msk [vmem:[#allocation3 + $0x8] sm:$0xff] %vm652, %v607
        %655 = vst.msk [vmem:[#allocation3 + $0x10] sm:$0xff] %vm652, %v609
        %656 = vst.msk [vmem:[#allocation3 + $0x18] sm:$0xff] %vm652, %v611
        %657 = vst.msk [vmem:[#allocation3 + $0x20] sm:$0xff] %vm652, %v613
        %658 = vst.msk [vmem:[#allocation3 + $0x28] sm:$0xff] %vm652, %v615
        %659 = vst.msk [vmem:[#allocation3 + $0x30] sm:$0xff] %vm652, %v617
        %660 = vst.msk [vmem:[#allocation3 + $0x38] sm:$0xff] %vm652, %v619
        %661 = vst.msk [vmem:[#allocation3 + $0x40] sm:$0xff] %vm652, %v621
        %662 = vst.msk [vmem:[#allocation3 + $0x48] sm:$0xff] %vm652, %v623
        %663 = vst.msk [vmem:[#allocation3 + $0x50] sm:$0xff] %vm652, %v625
        %664 = vst.msk [vmem:[#allocation3 + $0x58] sm:$0xff] %vm652, %v627
        %665 = vst.msk [vmem:[#allocation3 + $0x60] sm:$0xff] %vm652, %v629
        %666 = vst.msk [vmem:[#allocation3 + $0x68] sm:$0xff] %vm652, %v631
        %667 = vst.msk [vmem:[#allocation3 + $0x70] sm:$0xff] %vm652, %v633
        %668 = vst.msk [vmem:[#allocation3 + $0x78] sm:$0xff] %vm652, %v635
        %v669 = vld [vmem:[%s208 + $0x2] sm:$0xff]
        %v670 = vld [vmem:[%s208 + $0xa] sm:$0xff]
        %v671 = vld [vmem:[%s208 + $0x1a] sm:$0xff]
        %v672 = vld [vmem:[%s208 + $0x22] sm:$0xff]
        %v673 = vld [vmem:[%s208 + $0x32] sm:$0xff]
        %v674 = vld [vmem:[%s208 + $0x3a] sm:$0xff]
        %v675 = vld [vmem:[%s208 + $0x4a] sm:$0xff]
        %v676 = vld [vmem:[%s208 + $0x52] sm:$0xff]
        %v677 = vld [vmem:[%s208 + $0x62] sm:$0xff]
        %v678 = vld [vmem:[%s208 + $0x6a] sm:$0xff]
        %v679 = vld [vmem:[%s208 + $0x7a] sm:$0xff]
        %v680 = vld [vmem:[%s208 + $0x82] sm:$0xff]
        %v681 = vld [vmem:[%s208 + $0x92] sm:$0xff]
        %v682 = vld [vmem:[%s208 + $0x9a] sm:$0xff]
        %v683 = vld [vmem:[%s208 + $0xaa] sm:$0xff]
        %v684 = vld [vmem:[%s208 + $0xb2] sm:$0xff]
        %701 = vrot.lane.b32.xlu0 %v669, 20
        %v702 = vpop.permute.xlu0 %701
        %703 = vrot.lane.b32.xlu0 %v670, 20
        %v704 = vpop.permute.xlu0 %703
        %705 = vrot.lane.b32.xlu0 %v671, 20
        %v706 = vpop.permute.xlu0 %705
        %707 = vrot.lane.b32.xlu0 %v672, 20
        %v708 = vpop.permute.xlu0 %707
        %709 = vrot.lane.b32.xlu0 %v673, 20
        %v710 = vpop.permute.xlu0 %709
        %711 = vrot.lane.b32.xlu0 %v674, 20
        %v712 = vpop.permute.xlu0 %711
        %713 = vrot.lane.b32.xlu0 %v675, 20
        %v714 = vpop.permute.xlu0 %713
        %715 = vrot.lane.b32.xlu0 %v676, 20
        %v716 = vpop.permute.xlu0 %715
        %717 = vrot.lane.b32.xlu0 %v677, 20
        %v718 = vpop.permute.xlu0 %717
        %719 = vrot.lane.b32.xlu0 %v678, 20
        %v720 = vpop.permute.xlu0 %719
        %721 = vrot.lane.b32.xlu0 %v679, 20
        %v722 = vpop.permute.xlu0 %721
        %723 = vrot.lane.b32.xlu0 %v680, 20
        %v724 = vpop.permute.xlu0 %723
        %725 = vrot.lane.b32.xlu0 %v681, 20
        %v726 = vpop.permute.xlu0 %725
        %727 = vrot.lane.b32.xlu0 %v682, 20
        %v728 = vpop.permute.xlu0 %727
        %729 = vrot.lane.b32.xlu0 %v683, 20
        %v730 = vpop.permute.xlu0 %729
        %731 = vrot.lane.b32.xlu0 %v684, 20
        %v732 = vpop.permute.xlu0 %731
        %vm749 = vcmask 195744
        %750 = vst.msk [vmem:[#allocation3] sm:$0xff] %vm749, %v702
        %751 = vst.msk [vmem:[#allocation3 + $0x8] sm:$0xff] %vm749, %v704
        %752 = vst.msk [vmem:[#allocation3 + $0x10] sm:$0xff] %vm749, %v706
        %753 = vst.msk [vmem:[#allocation3 + $0x18] sm:$0xff] %vm749, %v708
        %754 = vst.msk [vmem:[#allocation3 + $0x20] sm:$0xff] %vm749, %v710
        %755 = vst.msk [vmem:[#allocation3 + $0x28] sm:$0xff] %vm749, %v712
        %756 = vst.msk [vmem:[#allocation3 + $0x30] sm:$0xff] %vm749, %v714
        %757 = vst.msk [vmem:[#allocation3 + $0x38] sm:$0xff] %vm749, %v716
        %758 = vst.msk [vmem:[#allocation3 + $0x40] sm:$0xff] %vm749, %v718
        %759 = vst.msk [vmem:[#allocation3 + $0x48] sm:$0xff] %vm749, %v720
        %760 = vst.msk [vmem:[#allocation3 + $0x50] sm:$0xff] %vm749, %v722
        %761 = vst.msk [vmem:[#allocation3 + $0x58] sm:$0xff] %vm749, %v724
        %762 = vst.msk [vmem:[#allocation3 + $0x60] sm:$0xff] %vm749, %v726
        %763 = vst.msk [vmem:[#allocation3 + $0x68] sm:$0xff] %vm749, %v728
        %764 = vst.msk [vmem:[#allocation3 + $0x70] sm:$0xff] %vm749, %v730
        %765 = vst.msk [vmem:[#allocation3 + $0x78] sm:$0xff] %vm749, %v732
        %s766 = scalar_lea.vmem [#allocation2], 48
        %v767 = vld [vmem:[%s766] sm:$0xff]
        %v768 = vld [vmem:[%s766 + $0x8] sm:$0xff]
        %v769 = vld [vmem:[%s766 + $0x18] sm:$0xff]
        %v770 = vld [vmem:[%s766 + $0x20] sm:$0xff]
        %v771 = vld [vmem:[%s766 + $0x30] sm:$0xff]
        %v772 = vld [vmem:[%s766 + $0x38] sm:$0xff]
        %v773 = vld [vmem:[%s766 + $0x48] sm:$0xff]
        %v774 = vld [vmem:[%s766 + $0x50] sm:$0xff]
        %v775 = vld [vmem:[%s766 + $0x60] sm:$0xff]
        %v776 = vld [vmem:[%s766 + $0x68] sm:$0xff]
        %v777 = vld [vmem:[%s766 + $0x78] sm:$0xff]
        %v778 = vld [vmem:[%s766 + $0x80] sm:$0xff]
        %v779 = vld [vmem:[%s766 + $0x90] sm:$0xff]
        %v780 = vld [vmem:[%s766 + $0x98] sm:$0xff]
        %v781 = vld [vmem:[%s766 + $0xa8] sm:$0xff]
        %v782 = vld [vmem:[%s766 + $0xb0] sm:$0xff]
        %799 = vrot.lane.b32.xlu0 %v767, 24
        %v800 = vpop.permute.xlu0 %799
        %801 = vrot.lane.b32.xlu0 %v768, 24
        %v802 = vpop.permute.xlu0 %801
        %803 = vrot.lane.b32.xlu0 %v769, 24
        %v804 = vpop.permute.xlu0 %803
        %805 = vrot.lane.b32.xlu0 %v770, 24
        %v806 = vpop.permute.xlu0 %805
        %807 = vrot.lane.b32.xlu0 %v771, 24
        %v808 = vpop.permute.xlu0 %807
        %809 = vrot.lane.b32.xlu0 %v772, 24
        %v810 = vpop.permute.xlu0 %809
        %811 = vrot.lane.b32.xlu0 %v773, 24
        %v812 = vpop.permute.xlu0 %811
        %813 = vrot.lane.b32.xlu0 %v774, 24
        %v814 = vpop.permute.xlu0 %813
        %815 = vrot.lane.b32.xlu0 %v775, 24
        %v816 = vpop.permute.xlu0 %815
        %817 = vrot.lane.b32.xlu0 %v776, 24
        %v818 = vpop.permute.xlu0 %817
        %819 = vrot.lane.b32.xlu0 %v777, 24
        %v820 = vpop.permute.xlu0 %819
        %821 = vrot.lane.b32.xlu0 %v778, 24
        %v822 = vpop.permute.xlu0 %821
        %823 = vrot.lane.b32.xlu0 %v779, 24
        %v824 = vpop.permute.xlu0 %823
        %825 = vrot.lane.b32.xlu0 %v780, 24
        %v826 = vpop.permute.xlu0 %825
        %827 = vrot.lane.b32.xlu0 %v781, 24
        %v828 = vpop.permute.xlu0 %827
        %829 = vrot.lane.b32.xlu0 %v782, 24
        %v830 = vpop.permute.xlu0 %829
        %vm847 = vcmask 228544
        %848 = vst.msk [vmem:[#allocation3] sm:$0xff] %vm847, %v800
        %849 = vst.msk [vmem:[#allocation3 + $0x8] sm:$0xff] %vm847, %v802
        %850 = vst.msk [vmem:[#allocation3 + $0x10] sm:$0xff] %vm847, %v804
        %851 = vst.msk [vmem:[#allocation3 + $0x18] sm:$0xff] %vm847, %v806
        %852 = vst.msk [vmem:[#allocation3 + $0x20] sm:$0xff] %vm847, %v808
        %853 = vst.msk [vmem:[#allocation3 + $0x28] sm:$0xff] %vm847, %v810
        %854 = vst.msk [vmem:[#allocation3 + $0x30] sm:$0xff] %vm847, %v812
        %855 = vst.msk [vmem:[#allocation3 + $0x38] sm:$0xff] %vm847, %v814
        %856 = vst.msk [vmem:[#allocation3 + $0x40] sm:$0xff] %vm847, %v816
        %857 = vst.msk [vmem:[#allocation3 + $0x48] sm:$0xff] %vm847, %v818
        %858 = vst.msk [vmem:[#allocation3 + $0x50] sm:$0xff] %vm847, %v820
        %859 = vst.msk [vmem:[#allocation3 + $0x58] sm:$0xff] %vm847, %v822
        %860 = vst.msk [vmem:[#allocation3 + $0x60] sm:$0xff] %vm847, %v824
        %861 = vst.msk [vmem:[#allocation3 + $0x68] sm:$0xff] %vm847, %v826
        %862 = vst.msk [vmem:[#allocation3 + $0x70] sm:$0xff] %vm847, %v828
        %863 = vst.msk [vmem:[#allocation3 + $0x78] sm:$0xff] %vm847, %v830
        %v864 = vld [vmem:[%s766 + $0x1] sm:$0xff]
        %v865 = vld [vmem:[%s766 + $0x9] sm:$0xff]
        %v866 = vld [vmem:[%s766 + $0x19] sm:$0xff]
        %v867 = vld [vmem:[%s766 + $0x21] sm:$0xff]
        %v868 = vld [vmem:[%s766 + $0x31] sm:$0xff]
        %v869 = vld [vmem:[%s766 + $0x39] sm:$0xff]
        %v870 = vld [vmem:[%s766 + $0x49] sm:$0xff]
        %v871 = vld [vmem:[%s766 + $0x51] sm:$0xff]
        %v872 = vld [vmem:[%s766 + $0x61] sm:$0xff]
        %v873 = vld [vmem:[%s766 + $0x69] sm:$0xff]
        %v874 = vld [vmem:[%s766 + $0x79] sm:$0xff]
        %v875 = vld [vmem:[%s766 + $0x81] sm:$0xff]
        %v876 = vld [vmem:[%s766 + $0x91] sm:$0xff]
        %v877 = vld [vmem:[%s766 + $0x99] sm:$0xff]
        %v878 = vld [vmem:[%s766 + $0xa9] sm:$0xff]
        %v879 = vld [vmem:[%s766 + $0xb1] sm:$0xff]
        %896 = vrot.lane.b32.xlu0 %v864, 28
        %v897 = vpop.permute.xlu0 %896
        %898 = vrot.lane.b32.xlu0 %v865, 28
        %v899 = vpop.permute.xlu0 %898
        %900 = vrot.lane.b32.xlu0 %v866, 28
        %v901 = vpop.permute.xlu0 %900
        %902 = vrot.lane.b32.xlu0 %v867, 28
        %v903 = vpop.permute.xlu0 %902
        %904 = vrot.lane.b32.xlu0 %v868, 28
        %v905 = vpop.permute.xlu0 %904
        %906 = vrot.lane.b32.xlu0 %v869, 28
        %v907 = vpop.permute.xlu0 %906
        %908 = vrot.lane.b32.xlu0 %v870, 28
        %v909 = vpop.permute.xlu0 %908
        %910 = vrot.lane.b32.xlu0 %v871, 28
        %v911 = vpop.permute.xlu0 %910
        %912 = vrot.lane.b32.xlu0 %v872, 28
        %v913 = vpop.permute.xlu0 %912
        %914 = vrot.lane.b32.xlu0 %v873, 28
        %v915 = vpop.permute.xlu0 %914
        %916 = vrot.lane.b32.xlu0 %v874, 28
        %v917 = vpop.permute.xlu0 %916
        %918 = vrot.lane.b32.xlu0 %v875, 28
        %v919 = vpop.permute.xlu0 %918
        %920 = vrot.lane.b32.xlu0 %v876, 28
        %v921 = vpop.permute.xlu0 %920
        %922 = vrot.lane.b32.xlu0 %v877, 28
        %v923 = vpop.permute.xlu0 %922
        %924 = vrot.lane.b32.xlu0 %v878, 28
        %v925 = vpop.permute.xlu0 %924
        %926 = vrot.lane.b32.xlu0 %v879, 28
        %v927 = vpop.permute.xlu0 %926
        %vm944 = vcmask 261344
        %945 = vst.msk [vmem:[#allocation3] sm:$0xff] %vm944, %v897
        %946 = vst.msk [vmem:[#allocation3 + $0x8] sm:$0xff] %vm944, %v899
        %947 = vst.msk [vmem:[#allocation3 + $0x10] sm:$0xff] %vm944, %v901
        %948 = vst.msk [vmem:[#allocation3 + $0x18] sm:$0xff] %vm944, %v903
        %949 = vst.msk [vmem:[#allocation3 + $0x20] sm:$0xff] %vm944, %v905
        %950 = vst.msk [vmem:[#allocation3 + $0x28] sm:$0xff] %vm944, %v907
        %951 = vst.msk [vmem:[#allocation3 + $0x30] sm:$0xff] %vm944, %v909
        %952 = vst.msk [vmem:[#allocation3 + $0x38] sm:$0xff] %vm944, %v911
        %953 = vst.msk [vmem:[#allocation3 + $0x40] sm:$0xff] %vm944, %v913
        %954 = vst.msk [vmem:[#allocation3 + $0x48] sm:$0xff] %vm944, %v915
        %955 = vst.msk [vmem:[#allocation3 + $0x50] sm:$0xff] %vm944, %v917
        %956 = vst.msk [vmem:[#allocation3 + $0x58] sm:$0xff] %vm944, %v919
        %957 = vst.msk [vmem:[#allocation3 + $0x60] sm:$0xff] %vm944, %v921
        %958 = vst.msk [vmem:[#allocation3 + $0x68] sm:$0xff] %vm944, %v923
        %959 = vst.msk [vmem:[#allocation3 + $0x70] sm:$0xff] %vm944, %v925
        %960 = vst.msk [vmem:[#allocation3 + $0x78] sm:$0xff] %vm944, %v927
        %v961 = vld [vmem:[%s766 + $0x2] sm:$0xff]
        %v962 = vld [vmem:[%s766 + $0xa] sm:$0xff]
        %v963 = vld [vmem:[%s766 + $0x1a] sm:$0xff]
        %v964 = vld [vmem:[%s766 + $0x22] sm:$0xff]
        %v965 = vld [vmem:[%s766 + $0x32] sm:$0xff]
        %v966 = vld [vmem:[%s766 + $0x3a] sm:$0xff]
        %v967 = vld [vmem:[%s766 + $0x4a] sm:$0xff]
        %v968 = vld [vmem:[%s766 + $0x52] sm:$0xff]
        %v969 = vld [vmem:[%s766 + $0x62] sm:$0xff]
        %v970 = vld [vmem:[%s766 + $0x6a] sm:$0xff]
        %v971 = vld [vmem:[%s766 + $0x7a] sm:$0xff]
        %v972 = vld [vmem:[%s766 + $0x82] sm:$0xff]
        %v973 = vld [vmem:[%s766 + $0x92] sm:$0xff]
        %v974 = vld [vmem:[%s766 + $0x9a] sm:$0xff]
        %v975 = vld [vmem:[%s766 + $0xaa] sm:$0xff]
        %v976 = vld [vmem:[%s766 + $0xb2] sm:$0xff]
        %993 = vrot.lane.b32.xlu0 %v961, 32
        %v994 = vpop.permute.xlu0 %993
        %995 = vrot.lane.b32.xlu0 %v962, 32
        %v996 = vpop.permute.xlu0 %995
        %997 = vrot.lane.b32.xlu0 %v963, 32
        %v998 = vpop.permute.xlu0 %997
        %999 = vrot.lane.b32.xlu0 %v964, 32
        %v1000 = vpop.permute.xlu0 %999
        %1001 = vrot.lane.b32.xlu0 %v965, 32
        %v1002 = vpop.permute.xlu0 %1001
        %1003 = vrot.lane.b32.xlu0 %v966, 32
        %v1004 = vpop.permute.xlu0 %1003
        %1005 = vrot.lane.b32.xlu0 %v967, 32
        %v1006 = vpop.permute.xlu0 %1005
        %1007 = vrot.lane.b32.xlu0 %v968, 32
        %v1008 = vpop.permute.xlu0 %1007
        %1009 = vrot.lane.b32.xlu0 %v969, 32
        %v1010 = vpop.permute.xlu0 %1009
        %1011 = vrot.lane.b32.xlu0 %v970, 32
        %v1012 = vpop.permute.xlu0 %1011
        %1013 = vrot.lane.b32.xlu0 %v971, 32
        %v1014 = vpop.permute.xlu0 %1013
        %1015 = vrot.lane.b32.xlu0 %v972, 32
        %v1016 = vpop.permute.xlu0 %1015
        %1017 = vrot.lane.b32.xlu0 %v973, 32
        %v1018 = vpop.permute.xlu0 %1017
        %1019 = vrot.lane.b32.xlu0 %v974, 32
        %v1020 = vpop.permute.xlu0 %1019
        %1021 = vrot.lane.b32.xlu0 %v975, 32
        %v1022 = vpop.permute.xlu0 %1021
        %1023 = vrot.lane.b32.xlu0 %v976, 32
        %v1024 = vpop.permute.xlu0 %1023
        %vm1041 = vcmask 294144
        %1042 = vst.msk [vmem:[#allocation3] sm:$0xff] %vm1041, %v994
        %1043 = vst.msk [vmem:[#allocation3 + $0x8] sm:$0xff] %vm1041, %v996
        %1044 = vst.msk [vmem:[#allocation3 + $0x10] sm:$0xff] %vm1041, %v998
        %1045 = vst.msk [vmem:[#allocation3 + $0x18] sm:$0xff] %vm1041, %v1000
        %1046 = vst.msk [vmem:[#allocation3 + $0x20] sm:$0xff] %vm1041, %v1002
        %1047 = vst.msk [vmem:[#allocation3 + $0x28] sm:$0xff] %vm1041, %v1004
        %1048 = vst.msk [vmem:[#allocation3 + $0x30] sm:$0xff] %vm1041, %v1006
        %1049 = vst.msk [vmem:[#allocation3 + $0x38] sm:$0xff] %vm1041, %v1008
        %1050 = vst.msk [vmem:[#allocation3 + $0x40] sm:$0xff] %vm1041, %v1010
        %1051 = vst.msk [vmem:[#allocation3 + $0x48] sm:$0xff] %vm1041, %v1012
        %1052 = vst.msk [vmem:[#allocation3 + $0x50] sm:$0xff] %vm1041, %v1014
        %1053 = vst.msk [vmem:[#allocation3 + $0x58] sm:$0xff] %vm1041, %v1016
        %1054 = vst.msk [vmem:[#allocation3 + $0x60] sm:$0xff] %vm1041, %v1018
        %1055 = vst.msk [vmem:[#allocation3 + $0x68] sm:$0xff] %vm1041, %v1020
        %1056 = vst.msk [vmem:[#allocation3 + $0x70] sm:$0xff] %vm1041, %v1022
        %1057 = vst.msk [vmem:[#allocation3 + $0x78] sm:$0xff] %vm1041, %v1024
        %v1058 = vld [vmem:[#allocation3] sm:$0xff]
        %v1059 = vld [vmem:[#allocation3 + $0x8] sm:$0xff]
        %v1060 = vld [vmem:[#allocation3 + $0x10] sm:$0xff]
        %v1061 = vld [vmem:[#allocation3 + $0x18] sm:$0xff]
        %v1062 = vld [vmem:[#allocation3 + $0x20] sm:$0xff]
        %v1063 = vld [vmem:[#allocation3 + $0x28] sm:$0xff]
        %v1064 = vld [vmem:[#allocation3 + $0x30] sm:$0xff]
        %v1065 = vld [vmem:[#allocation3 + $0x38] sm:$0xff]
        %v1066 = vld [vmem:[#allocation3 + $0x40] sm:$0xff]
        %v1067 = vld [vmem:[#allocation3 + $0x48] sm:$0xff]
        %v1068 = vld [vmem:[#allocation3 + $0x50] sm:$0xff]
        %v1069 = vld [vmem:[#allocation3 + $0x58] sm:$0xff]
        %v1070 = vld [vmem:[#allocation3 + $0x60] sm:$0xff]
        %v1071 = vld [vmem:[#allocation3 + $0x68] sm:$0xff]
        %v1072 = vld [vmem:[#allocation3 + $0x70] sm:$0xff]
        %v1073 = vld [vmem:[#allocation3 + $0x78] sm:$0xff]
        %v1074 = vld [vmem:[%s1] sm:$0xff]
        %v1075 = vld [vmem:[%s1 + $0x8] sm:$0xff]
        %v1076 = vld [vmem:[%s1 + $0x10] sm:$0xff]
        %v1077 = vld [vmem:[%s1 + $0x18] sm:$0xff]
        %v1078 = vld [vmem:[%s1 + $0x20] sm:$0xf]
        %vm1079 = vcmask 293888
        %v1081 = vsel %vm1079, %v1058, 0
        %v1084 = vsel %vm1079, %v1059, 0
        %v1087 = vsel %vm1079, %v1060, 0
        %v1090 = vsel %vm1079, %v1061, 0
        %v1093 = vsel %vm1079, %v1062, 0
        %v1096 = vsel %vm1079, %v1063, 0
        %v1099 = vsel %vm1079, %v1064, 0
        %v1102 = vsel %vm1079, %v1065, 0
        %v1105 = vsel %vm1079, %v1066, 0
        %v1108 = vsel %vm1079, %v1067, 0
        %v1111 = vsel %vm1079, %v1068, 0
        %v1114 = vsel %vm1079, %v1069, 0
        %v1117 = vsel %vm1079, %v1070, 0
        %v1120 = vsel %vm1079, %v1071, 0
        %v1123 = vsel %vm1079, %v1072, 0
        %v1126 = vsel %vm1079, %v1073, 0
        %vm1128 = vcmask 1043456
        %v1130 = vsel %vm1128, %v1078, 0
        %1132 = vmatprep.subr.mxu0 0.0
        %1133 = vmatpush1.msra.mxu0 0.0
        %1134 = vmatprep.subr.mxu0 0.0
        %1135 = vmatpush1.msra.mxu0 0.0
        %1136 = vmatprep.subr.mxu0 0.0
        %1137 = vmatpush1.msra.mxu0 0.0
        %1138 = vmatprep.subr.mxu0 0.0
        %1139 = vmatpush1.msra.mxu0 0.0
        %1140 = vmatprep.subr.mxu0 0.0
        %1141 = vmatpush1.msra.mxu0 0.0
        %1142 = vmatprep.subr.mxu0 0.0
        %1143 = vmatpush1.msra.mxu0 0.0
        %1144 = vmatprep.subr.mxu0 0.0
        %1145 = vmatpush1.msra.mxu0 0.0
        %1146 = vmatprep.subr.mxu0 0.0
        %1147 = vmatpush1.msra.mxu0 0.0
        %1148 = vmatprep.subr.mxu0 0.0
        %1149 = vmatpush1.msra.mxu0 0.0
        %1150 = vmatprep.subr.mxu0 0.0
        %1151 = vmatpush1.msra.mxu0 0.0
        %1152 = vmatprep.subr.mxu0 0.0
        %1153 = vmatpush1.msra.mxu0 0.0
        %1154 = vmatprep.subr.mxu0 0.0
        %1155 = vmatpush1.msra.mxu0 %v1130
        %1156 = vmatprep.subr.mxu0 0.0
        %1157 = vmatpush1.msra.mxu0 %v1077
        %1158 = vmatprep.subr.mxu0 0.0
        %1159 = vmatpush1.msra.mxu0 %v1076
        %1160 = vmatprep.subr.mxu0 0.0
        %1161 = vmatpush1.msra.mxu0 %v1075
        %1162 = vmatprep.subr.mxu0 0.0
        %1163 = vmatpush1.msra.mxu0 %v1074
        %1164 = vmatprep.subr.mxu0 0.0
        %1165 = vmatpush2.msra.mxu0 0.0
        %1166 = vmatprep.subr.mxu0 0.0
        %1167 = vmatpush2.msra.mxu0 0.0
        %1168 = vmatprep.subr.mxu0 0.0
        %1169 = vmatpush2.msra.mxu0 0.0
        %1170 = vmatprep.subr.mxu0 0.0
        %1171 = vmatpush2.msra.mxu0 0.0
        %1172 = vmatprep.subr.mxu0 0.0
        %1173 = vmatpush2.msra.mxu0 0.0
        %1174 = vmatprep.subr.mxu0 0.0
        %1175 = vmatpush2.msra.mxu0 0.0
        %1176 = vmatprep.subr.mxu0 0.0
        %1177 = vmatpush2.msra.mxu0 0.0
        %1178 = vmatprep.subr.mxu0 0.0
        %1179 = vmatpush2.msra.mxu0 0.0
        %1180 = vmatprep.subr.mxu0 0.0
        %1181 = vmatpush2.msra.mxu0 0.0
        %1182 = vmatprep.subr.mxu0 0.0
        %1183 = vmatpush2.msra.mxu0 0.0
        %1184 = vmatprep.subr.mxu0 0.0
        %1185 = vmatpush2.msra.mxu0 0.0
        %1186 = vmatprep.subr.mxu0 0.0
        %1187 = vmatpush2.msra.mxu0 0.0
        %1188 = vmatprep.subr.mxu0 0.0
        %1189 = vmatpush2.msra.mxu0 0.0
        %1190 = vmatprep.subr.mxu0 0.0
        %1191 = vmatpush2.msra.mxu0 0.0
        %1192 = vmatprep.subr.mxu0 0.0
        %1193 = vmatpush2.msra.mxu0 0.0
        %1194 = vmatprep.subr.mxu0 0.0
        %1195 = vmatpush2.msra.mxu0 0.0
        %1196 = vmatprep.mubr.f32.mxu0 0.0
        %1197 = vmatmul.mubr.f32.gmra.mxu0 %v1081
        %v1198 = vpop.f32.mrf.mxu0
        %v1199 = vadd.f32 0.0, %v1198
        %v1200 = vpop.f32.mrf.mxu0
        %1201 = vmatprep.mubr.f32.mxu0 0.0
        %1202 = vmatmul.mubr.f32.gmra.mxu0 %v1084
        %v1203 = vpop.f32.mrf.mxu0
        %v1204 = vadd.f32 0.0, %v1203
        %v1205 = vpop.f32.mrf.mxu0
        %1206 = vmatprep.mubr.f32.mxu0 0.0
        %1207 = vmatmul.mubr.f32.gmra.mxu0 %v1087
        %v1208 = vpop.f32.mrf.mxu0
        %v1209 = vadd.f32 0.0, %v1208
        %v1210 = vpop.f32.mrf.mxu0
        %1211 = vmatprep.mubr.f32.mxu0 0.0
        %1212 = vmatmul.mubr.f32.gmra.mxu0 %v1090
        %v1213 = vpop.f32.mrf.mxu0
        %v1214 = vadd.f32 0.0, %v1213
        %v1215 = vpop.f32.mrf.mxu0
        %1216 = vmatprep.mubr.f32.mxu0 0.0
        %1217 = vmatmul.mubr.f32.gmra.mxu0 %v1093
        %v1218 = vpop.f32.mrf.mxu0
        %v1219 = vadd.f32 0.0, %v1218
        %v1220 = vpop.f32.mrf.mxu0
        %1221 = vmatprep.mubr.f32.mxu0 0.0
        %1222 = vmatmul.mubr.f32.gmra.mxu0 %v1096
        %v1223 = vpop.f32.mrf.mxu0
        %v1224 = vadd.f32 0.0, %v1223
        %v1225 = vpop.f32.mrf.mxu0
        %1226 = vmatprep.mubr.f32.mxu0 0.0
        %1227 = vmatmul.mubr.f32.gmra.mxu0 %v1099
        %v1228 = vpop.f32.mrf.mxu0
        %v1229 = vadd.f32 0.0, %v1228
        %v1230 = vpop.f32.mrf.mxu0
        %1231 = vmatprep.mubr.f32.mxu0 0.0
        %1232 = vmatmul.mubr.f32.gmra.mxu0 %v1102
        %v1233 = vpop.f32.mrf.mxu0
        %v1234 = vadd.f32 0.0, %v1233
        %v1235 = vpop.f32.mrf.mxu0
        %1236 = vmatprep.mubr.f32.mxu0 0.0
        %1237 = vmatmul.mubr.f32.gmra.mxu0 %v1105
        %v1238 = vpop.f32.mrf.mxu0
        %v1239 = vadd.f32 0.0, %v1238
        %v1240 = vpop.f32.mrf.mxu0
        %1241 = vmatprep.mubr.f32.mxu0 0.0
        %1242 = vmatmul.mubr.f32.gmra.mxu0 %v1108
        %v1243 = vpop.f32.mrf.mxu0
        %v1244 = vadd.f32 0.0, %v1243
        %v1245 = vpop.f32.mrf.mxu0
        %1246 = vmatprep.mubr.f32.mxu0 0.0
        %1247 = vmatmul.mubr.f32.gmra.mxu0 %v1111
        %v1248 = vpop.f32.mrf.mxu0
        %v1249 = vadd.f32 0.0, %v1248
        %v1250 = vpop.f32.mrf.mxu0
        %1251 = vmatprep.mubr.f32.mxu0 0.0
        %1252 = vmatmul.mubr.f32.gmra.mxu0 %v1114
        %v1253 = vpop.f32.mrf.mxu0
        %v1254 = vadd.f32 0.0, %v1253
        %v1255 = vpop.f32.mrf.mxu0
        %1256 = vmatprep.mubr.f32.mxu0 0.0
        %1257 = vmatmul.mubr.f32.gmra.mxu0 %v1117
        %v1258 = vpop.f32.mrf.mxu0
        %v1259 = vadd.f32 0.0, %v1258
        %v1260 = vpop.f32.mrf.mxu0
        %1261 = vmatprep.mubr.f32.mxu0 0.0
        %1262 = vmatmul.mubr.f32.gmra.mxu0 %v1120
        %v1263 = vpop.f32.mrf.mxu0
        %v1264 = vadd.f32 0.0, %v1263
        %v1265 = vpop.f32.mrf.mxu0
        %1266 = vmatprep.mubr.f32.mxu0 0.0
        %1267 = vmatmul.mubr.f32.gmra.mxu0 %v1123
        %v1268 = vpop.f32.mrf.mxu0
        %v1269 = vadd.f32 0.0, %v1268
        %v1270 = vpop.f32.mrf.mxu0
        %1271 = vmatprep.mubr.f32.mxu0 0.0
        %1272 = vmatmul.mubr.f32.gmra.mxu0 %v1126
        %v1273 = vpop.f32.mrf.mxu0
        %v1274 = vadd.f32 0.0, %v1273
        %v1275 = vpop.f32.mrf.mxu0
        %1276 = vdwg.mxu0
        %1277 = vst [vmem:[%s150] sm:$0xff] %v1199
        %1278 = vst [vmem:[%s150 + $0x8] sm:$0xff] %v1204
        %1279 = vst [vmem:[%s150 + $0x10] sm:$0xff] %v1209
        %1280 = vst [vmem:[%s150 + $0x18] sm:$0xff] %v1214
        %1281 = vst [vmem:[%s150 + $0x20] sm:$0xff] %v1219
        %1282 = vst [vmem:[%s150 + $0x28] sm:$0xff] %v1224
        %1283 = vst [vmem:[%s150 + $0x30] sm:$0xff] %v1229
        %1284 = vst [vmem:[%s150 + $0x38] sm:$0xff] %v1234
        %1285 = vst [vmem:[%s150 + $0x40] sm:$0xff] %v1239
        %1286 = vst [vmem:[%s150 + $0x48] sm:$0xff] %v1244
        %1287 = vst [vmem:[%s150 + $0x50] sm:$0xff] %v1249
        %1288 = vst [vmem:[%s150 + $0x58] sm:$0xff] %v1254
        %1289 = vst [vmem:[%s150 + $0x60] sm:$0xff] %v1259
        %1290 = vst [vmem:[%s150 + $0x68] sm:$0xff] %v1264
        %1291 = vst [vmem:[%s150 + $0x70] sm:$0xff] %v1269
        %1292 = vst [vmem:[%s150 + $0x78] sm:$0xff] %v1274
        %s1293 = sand.u32 %s85, 1
        %s1294 = scalar_lea.sflag [#allocation5], %s1293
        %s1295 = sand.u32 %s85, 1
        %s1296 = smul.addr %s1295, 128
        %s1297 = scalar_lea.vmem [#allocation4], %s1296
        // Predicated region
        $region37: #{tpu_custom_call.1} parent=27 // pred_check
          %p1298 = pneg %p95
        $region38: #{tpu_custom_call.1} parent=27 // pred_check_branch
          %1300 = sbr.rel (%p1298) target = $region40
        $region39: #{tpu_custom_call.1} parent=27 // pred_region
          %s1301 = smul.u32 16, %s21
          %s1303 = ssub.s32 2048, 2048
          %1304 = vsyncadd %s1294, %s1303
          %s1305 = smul.addr %s20, 32
          %s1306 = sadd.s32 %s1301, %s1305
          %s1307 = smul.addr %s1306, 128
          %s1308 = scalar_lea.hbm %s2, %s1307
          %s1309 = sshll.u32 %s1297, 4
          %s1310 = int_to_ptr.vmem [resolvable:$true] %s1309
          %1315 = dma.vmem_to_hbm [thread:$0]  %s1310, 2048, %s1308, %s1294, 128, 128, 8
        $region40: #{tpu_custom_call.1} parent=27 // pred_fallthru
          _
      $region28: #{tpu_custom_call.1} parent=5 // pred_fallthru
        _
      %p1316 = scmp.le.s32.totalorder 2, %s11
      // Predicated region
      $region41: #{tpu_custom_call.1} parent=5 // pred_check
        %p1317 = pneg %p1316
      $region42: #{tpu_custom_call.1} parent=5 // pred_check_branch
        %1319 = sbr.rel (%p1317) target = $region44
      $region43: #{tpu_custom_call.1} parent=5 // pred_region
        %s1320 = ssub.s32 %s11, 2
        // Predicated region
        $region45: #{tpu_custom_call.1} parent=43 // pred_check
          %p1321 = pneg %p101
        $region46: #{tpu_custom_call.1} parent=43 // pred_check_branch
          %1323 = sbr.rel (%p1321) target = $region48
        $region47: #{tpu_custom_call.1} parent=43 // pred_region
          %s1324 = sand.u32 %s86, 1
          %s1325 = scalar_lea.sflag [#allocation5], %s1324
          %s1326 = sand.u32 %s86, 1
          %s1327 = smul.addr %s1326, 128
          %s1328 = scalar_lea.vmem [#allocation4], %s1327
          %1329 = dma.done %s1325, 2048
        $region48: #{tpu_custom_call.1} parent=43 // pred_fallthru
          _
      $region44: #{tpu_custom_call.1} parent=5 // pred_fallthru
        _
    $region6: #{tpu_custom_call.1} parent=1 // loop_footer
      %s15 = sadd.s32 1, %s11
    $region7: #{tpu_custom_call.1} parent=1 // loop_footer_branch
      %10 = sbr.rel target = $region3
    $region8: #{tpu_custom_call.1} parent=1 // loop_exit
      _
    %1330 = vsyncpa [#allocation5], 1
    %s1331 = scalar_lea.sflag [#allocation5], 1
    %1332 = vsyncpa %s1331, 1

</llo_original>
